<compile_context>
chip_gen: v5e
topology: v5e:2x2
jax: 0.10.0
libtpu: 0.0.40
codegen_flags: <defaults>
</compile_context>

<pallas_src>
import functools

import jax
import jax.numpy as jnp
from jax.experimental import pallas as pl
from jax.experimental.pallas import tpu as pltpu


def _unet_down_kernel(ph_ref, w_ref, o_ref, *, normalize):
    """One (batch element, output-channel tile) grid step.

    ph_ref: (1, 4, C_in, OH+1, OW+1) bf16   stride-2 phase planes of the padded input
    w_ref : (c_blk, 16*C_in)         bf16   weights, K index = (kh*4 + kw)*C_in + ci
    o_ref : (1, c_blk, OH*OW)               output, channel-major (lane-dense in S)
    """
    _, _, c_in, ohp1, owp1 = ph_ref.shape
    oh, ow = ohp1 - 1, owp1 - 1
    s = oh * ow

    # conv[co, y, x] = sum_{kh,kw,ci} xpad[ci, 2y+kh, 2x+kw] * W[co, ci, kh, kw]
    # xpad[2y+kh, 2x+kw] lives in phase plane p = (kh%2)*2 + (kw%2) at offset
    # (y + kh//2, x + kw//2), i.e. a contiguous (OH, OW) window -> unit-stride slices,
    # no strided gathers.  Concatenating the 16 taps along the channel axis gives a
    # single (16*C_in, S) RHS, so the whole conv is ONE MXU matmul with a full
    # contraction depth and no per-tap VALU add chain.
    planes = ph_ref[0]                                    # (4, C_in, OH+1, OW+1) bf16
    taps = []
    for kh in range(4):
        dh, p_h = kh // 2, kh % 2
        for kw in range(4):
            dw, p_w = kw // 2, kw % 2
            win = planes[p_h * 2 + p_w, :, dh:dh + oh, dw:dw + ow]   # (C_in, OH, OW)
            taps.append(win.reshape(c_in, s))
    rhs = jnp.concatenate(taps, axis=0)                   # (16*C_in, S) bf16

    # Channel-major accumulator straight out of the MXU: no trailing transpose.
    acc = jnp.dot(w_ref[...], rhs, preferred_element_type=jnp.float32)  # (c_blk, S) f32

    if normalize:
        # InstanceNorm2d defaults: biased variance over the spatial dim, eps=1e-5
        # inside rsqrt, no affine.  One-pass stats; mean folded into the scale.
        inv_s = 1.0 / s
        mean = jnp.sum(acc, axis=1, keepdims=True) * inv_s             # (c_blk, 1)
        mean_sq = jnp.sum(acc * acc, axis=1, keepdims=True) * inv_s
        r = jax.lax.rsqrt(mean_sq - mean * mean + 1e-5)
        acc = acc * r - mean * r

    acc = jnp.where(acc >= 0.0, acc, 0.2 * acc)           # LeakyReLU(0.2)
    o_ref[0] = acc.astype(o_ref.dtype)


def _tpu_tuning():
    """(preferred channel-tile width, per-core VMEM cap bytes) for the local TPU."""
    prefer, vmem_cap = 256, 100 * 1024 * 1024             # v6e default (128 MiB phys)
    try:
        kind = jax.devices()[0].device_kind.lower()
    except Exception:
        return prefer, vmem_cap
    if "v5 lite" in kind or "v5lite" in kind or "v5e" in kind:
        prefer = 128                                       # MXU is 4x128^2; 256 adds nothing
    if "v7" in kind:
        vmem_cap = 56 * 1024 * 1024                        # 64 MiB physical per TensorCore
    return prefer, vmem_cap


def _working_set_bytes(c_in, oh, ow, c_blk, out_bytes):
    s = oh * ow
    in_blk = 4 * c_in * (oh + 1) * (ow + 1) * 2            # bf16 phase planes block
    w_blk = 16 * c_in * c_blk * 2                          # bf16 weight tile
    out_blk = c_blk * s * out_bytes                        # output block
    temps = 2 * (16 * c_in * s * 2) + c_blk * s * 4        # RHS (+ tap copies) + f32 acc
    return 2 * (in_blk + w_blk + out_blk) + temps          # x2: double-buffered blocks


def _pick_c_blk(c_out, n_batch, c_in, oh, ow, out_bytes, prefer, vmem_cap):
    # Largest multiple-of-8 divisor of C_out that is <= prefer (fills the MXU N-dim).
    c_blk = c_out
    if c_out > prefer:
        for cand in range(prefer, 7, -1):
            if cand % 8 == 0 and c_out % cand == 0:
                c_blk = cand
                break
    # v7x megacore: guarantee >= 2 grid points when N == 1 so both cores get work.
    if n_batch == 1 and c_out // c_blk < 2:
        for cand in range(c_blk // 2, 7, -1):
            if cand % 8 == 0 and c_out % cand == 0:
                c_blk = cand
                break
    # Shrink the channel tile if the per-step working set would not fit the VMEM cap.
    while (_working_set_bytes(c_in, oh, ow, c_blk, out_bytes) > vmem_cap
           and c_blk % 16 == 0 and c_out % (c_blk // 2) == 0):
        c_blk //= 2
    return c_blk


@functools.partial(jax.jit, static_argnames=("normalize", "out_dtype"))
def unet_down(x_nchw, weight, normalize=True, out_dtype=jnp.float32):
    """UNetDown forward.

    x_nchw: (N, C_in, H, W) f32
    weight: (C_out, C_in, 4, 4) f32 (PyTorch Conv2d OIHW layout, bias=False)
    returns (N, C_out, H//2, W//2) out_dtype
    """
    N, C_in, H, W = x_nchw.shape
    C_out = weight.shape[0]
    assert weight.shape == (C_out, C_in, 4, 4)
    assert H % 2 == 0 and W % 2 == 0, "k=4, s=2, p=1 conv assumes even H, W"
    OH, OW = H // 2, W // 2
    S = OH * OW

    # ---- cheap XLA-side prep: pad + split into the 4 stride-phase planes ----
    # phases[n, p, c, bh, bw] = xpad[n, c, 2*bh + p//2, 2*bw + p%2].  Channel-major so
    # the kernel's taps come out (C_in, OH, OW) and the matmul output is already
    # channel-major; bf16 so HBM traffic ~= input bytes (no im2col blowup).
    xp = jnp.pad(x_nchw, ((0, 0), (0, 0), (1, 1), (1, 1)))            # (N, C, H+2, W+2)
    xr = xp.reshape(N, C_in, OH + 1, 2, OW + 1, 2)
    phases = xr.transpose(0, 3, 5, 1, 2, 4).reshape(N, 4, C_in, OH + 1, OW + 1)
    phases = phases.astype(jnp.bfloat16)

    # Weights flattened to (C_out, 16*C_in); K index = (kh*4 + kw)*C_in + ci.
    w_flat = jnp.transpose(weight, (0, 2, 3, 1)).reshape(C_out, 16 * C_in)
    w_flat = w_flat.astype(jnp.bfloat16)

    out_bytes = jnp.dtype(out_dtype).itemsize
    prefer, vmem_cap = _tpu_tuning()
    c_blk = _pick_c_blk(C_out, N, C_in, OH, OW, out_bytes, prefer, vmem_cap)
    n_cblk = C_out // c_blk

    ws = _working_set_bytes(C_in, OH, OW, c_blk, out_bytes)
    vmem_limit = int(min(max(1.5 * ws, 32 * 1024 * 1024), vmem_cap))

    kernel = functools.partial(_unet_down_kernel, normalize=normalize)

    out = pl.pallas_call(
        kernel,
        out_shape=jax.ShapeDtypeStruct((N, C_out, S), out_dtype),
        grid=(N, n_cblk),   # channel axis innermost => phase block reused across it
        in_specs=[
            pl.BlockSpec((1, 4, C_in, OH + 1, OW + 1), lambda n, c: (n, 0, 0, 0, 0)),
            pl.BlockSpec((c_blk, 16 * C_in), lambda n, c: (c, 0)),
        ],
        out_specs=pl.BlockSpec((1, c_blk, S), lambda n, c: (n, c, 0)),
        compiler_params=pltpu.CompilerParams(
            dimension_semantics=("parallel", "parallel"),
            vmem_limit_bytes=vmem_limit,
        ),
        cost_estimate=pl.CostEstimate(
            flops=2 * N * S * (16 * C_in) * C_out,
            transcendentals=0,
            bytes_accessed=phases.size * 2 + w_flat.size * 2 + N * C_out * S * out_bytes,
        ),
    )(phases, w_flat)

    # (N, C_out, S) -> NCHW is a free reshape (no XLA transpose pass over the output).
    return out.reshape(N, C_out, OH, OW)


def _reference(x_nchw, weight):
    """Plain-JAX f32 reference for validation."""
    conv = jax.lax.conv_general_dilated(
        x_nchw, weight,
        window_strides=(2, 2),
        padding=((1, 1), (1, 1)),
        dimension_numbers=("NCHW", "OIHW", "NCHW"),
    )
    mean = jnp.mean(conv, axis=(2, 3), keepdims=True)
    var = jnp.mean((conv - mean) ** 2, axis=(2, 3), keepdims=True)
    xn = (conv - mean) * jax.lax.rsqrt(var + 1e-5)
    return jnp.where(xn >= 0, xn, 0.2 * xn)


if __name__ == "__main__":
    key = jax.random.PRNGKey(0)
    kx, kw = jax.random.split(key)

    N, C_in, H, W = 2, 4, 16, 16
    C_out = 8

    x = jax.random.normal(kx, (N, C_in, H, W), dtype=jnp.float32)
    # Deterministic Kaiming-style init for Conv2d(in_size, out_size, 4, bias=False)
    fan_in = C_in * 4 * 4
    weight = jax.random.normal(kw, (C_out, C_in, 4, 4), dtype=jnp.float32) * (2.0 / fan_in) ** 0.5

    y = jax.block_until_ready(unet_down(x, weight))
    y_ref = _reference(x, weight)

    assert y.shape == (N, C_out, H // 2, W // 2), y.shape
    # bf16 matmul inputs (f32 accumulation) => relaxed tolerance vs the f32 reference.
    assert jnp.allclose(y, y_ref, atol=3e-2, rtol=3e-2), float(jnp.max(jnp.abs(y - y_ref)))

    print("KERNEL_OK")
</pallas_src>

<mosaic_0001>
module attributes {stable_mosaic.version = 11 : i64} {
  func.func @_unet_down_kernel(%arg0: i32, %arg1: i32, %arg2: memref<1x4x4x9x9xbf16, #tpu.memory_space<vmem>>, %arg3: memref<8x64xbf16, #tpu.memory_space<vmem>>, %arg4: memref<1x8x64xf32, #tpu.memory_space<vmem>>) attributes {dimension_semantics = [#tpu.dimension_semantics<parallel>, #tpu.dimension_semantics<parallel>], iteration_bounds = array<i64: 2, 1>, scalar_prefetch = 0 : i64, scratch_operands = 0 : i64, tpu.core_type = #tpu.core_type<tc>, window_params = [{transform_indices = @transform_0, window_bounds = array<i64: 1, 4, 4, 9, 9>}, {transform_indices = @transform_1, window_bounds = array<i64: 8, 64>}, {transform_indices = @transform_2, window_bounds = array<i64: 1, 8, 64>}]} {
    %c0 = arith.constant 0 : index
    %c0_0 = arith.constant 0 : index
    %c0_1 = arith.constant 0 : index
    %c0_2 = arith.constant 0 : index
    %c0_3 = arith.constant 0 : index
    %0 = vector.load %arg2[%c0, %c0_0, %c0_1, %c0_2, %c0_3] : memref<1x4x4x9x9xbf16, #tpu.memory_space<vmem>>, vector<1x4x4x9x9xbf16>
    %1 = vector.shape_cast %0 : vector<1x4x4x9x9xbf16> to vector<4x4x9x9xbf16>
    %2 = vector.extract_strided_slice %1 {offsets = [0, 0, 0, 0], sizes = [1, 4, 8, 8], strides = [1, 1, 1, 1]} : vector<4x4x9x9xbf16> to vector<1x4x8x8xbf16>
    %3 = vector.shape_cast %2 : vector<1x4x8x8xbf16> to vector<4x8x8xbf16>
    %4 = vector.shape_cast %3 : vector<4x8x8xbf16> to vector<4x64xbf16>
    %5 = vector.extract_strided_slice %1 {offsets = [1, 0, 0, 0], sizes = [1, 4, 8, 8], strides = [1, 1, 1, 1]} : vector<4x4x9x9xbf16> to vector<1x4x8x8xbf16>
    %6 = vector.shape_cast %5 : vector<1x4x8x8xbf16> to vector<4x8x8xbf16>
    %7 = vector.shape_cast %6 : vector<4x8x8xbf16> to vector<4x64xbf16>
    %8 = vector.extract_strided_slice %1 {offsets = [0, 0, 0, 1], sizes = [1, 4, 8, 8], strides = [1, 1, 1, 1]} : vector<4x4x9x9xbf16> to vector<1x4x8x8xbf16>
    %9 = vector.shape_cast %8 : vector<1x4x8x8xbf16> to vector<4x8x8xbf16>
    %10 = vector.shape_cast %9 : vector<4x8x8xbf16> to vector<4x64xbf16>
    %11 = vector.extract_strided_slice %1 {offsets = [1, 0, 0, 1], sizes = [1, 4, 8, 8], strides = [1, 1, 1, 1]} : vector<4x4x9x9xbf16> to vector<1x4x8x8xbf16>
    %12 = vector.shape_cast %11 : vector<1x4x8x8xbf16> to vector<4x8x8xbf16>
    %13 = vector.shape_cast %12 : vector<4x8x8xbf16> to vector<4x64xbf16>
    %14 = vector.extract_strided_slice %1 {offsets = [2, 0, 0, 0], sizes = [1, 4, 8, 8], strides = [1, 1, 1, 1]} : vector<4x4x9x9xbf16> to vector<1x4x8x8xbf16>
    %15 = vector.shape_cast %14 : vector<1x4x8x8xbf16> to vector<4x8x8xbf16>
    %16 = vector.shape_cast %15 : vector<4x8x8xbf16> to vector<4x64xbf16>
    %17 = vector.extract_strided_slice %1 {offsets = [3, 0, 0, 0], sizes = [1, 4, 8, 8], strides = [1, 1, 1, 1]} : vector<4x4x9x9xbf16> to vector<1x4x8x8xbf16>
    %18 = vector.shape_cast %17 : vector<1x4x8x8xbf16> to vector<4x8x8xbf16>
    %19 = vector.shape_cast %18 : vector<4x8x8xbf16> to vector<4x64xbf16>
    %20 = vector.extract_strided_slice %1 {offsets = [2, 0, 0, 1], sizes = [1, 4, 8, 8], strides = [1, 1, 1, 1]} : vector<4x4x9x9xbf16> to vector<1x4x8x8xbf16>
    %21 = vector.shape_cast %20 : vector<1x4x8x8xbf16> to vector<4x8x8xbf16>
    %22 = vector.shape_cast %21 : vector<4x8x8xbf16> to vector<4x64xbf16>
    %23 = vector.extract_strided_slice %1 {offsets = [3, 0, 0, 1], sizes = [1, 4, 8, 8], strides = [1, 1, 1, 1]} : vector<4x4x9x9xbf16> to vector<1x4x8x8xbf16>
    %24 = vector.shape_cast %23 : vector<1x4x8x8xbf16> to vector<4x8x8xbf16>
    %25 = vector.shape_cast %24 : vector<4x8x8xbf16> to vector<4x64xbf16>
    %26 = vector.extract_strided_slice %1 {offsets = [0, 0, 1, 0], sizes = [1, 4, 8, 8], strides = [1, 1, 1, 1]} : vector<4x4x9x9xbf16> to vector<1x4x8x8xbf16>
    %27 = vector.shape_cast %26 : vector<1x4x8x8xbf16> to vector<4x8x8xbf16>
    %28 = vector.shape_cast %27 : vector<4x8x8xbf16> to vector<4x64xbf16>
    %29 = vector.extract_strided_slice %1 {offsets = [1, 0, 1, 0], sizes = [1, 4, 8, 8], strides = [1, 1, 1, 1]} : vector<4x4x9x9xbf16> to vector<1x4x8x8xbf16>
    %30 = vector.shape_cast %29 : vector<1x4x8x8xbf16> to vector<4x8x8xbf16>
    %31 = vector.shape_cast %30 : vector<4x8x8xbf16> to vector<4x64xbf16>
    %32 = vector.extract_strided_slice %1 {offsets = [0, 0, 1, 1], sizes = [1, 4, 8, 8], strides = [1, 1, 1, 1]} : vector<4x4x9x9xbf16> to vector<1x4x8x8xbf16>
    %33 = vector.shape_cast %32 : vector<1x4x8x8xbf16> to vector<4x8x8xbf16>
    %34 = vector.shape_cast %33 : vector<4x8x8xbf16> to vector<4x64xbf16>
    %35 = vector.extract_strided_slice %1 {offsets = [1, 0, 1, 1], sizes = [1, 4, 8, 8], strides = [1, 1, 1, 1]} : vector<4x4x9x9xbf16> to vector<1x4x8x8xbf16>
    %36 = vector.shape_cast %35 : vector<1x4x8x8xbf16> to vector<4x8x8xbf16>
    %37 = vector.shape_cast %36 : vector<4x8x8xbf16> to vector<4x64xbf16>
    %38 = vector.extract_strided_slice %1 {offsets = [2, 0, 1, 0], sizes = [1, 4, 8, 8], strides = [1, 1, 1, 1]} : vector<4x4x9x9xbf16> to vector<1x4x8x8xbf16>
    %39 = vector.shape_cast %38 : vector<1x4x8x8xbf16> to vector<4x8x8xbf16>
    %40 = vector.shape_cast %39 : vector<4x8x8xbf16> to vector<4x64xbf16>
    %41 = vector.extract_strided_slice %1 {offsets = [3, 0, 1, 0], sizes = [1, 4, 8, 8], strides = [1, 1, 1, 1]} : vector<4x4x9x9xbf16> to vector<1x4x8x8xbf16>
    %42 = vector.shape_cast %41 : vector<1x4x8x8xbf16> to vector<4x8x8xbf16>
    %43 = vector.shape_cast %42 : vector<4x8x8xbf16> to vector<4x64xbf16>
    %44 = vector.extract_strided_slice %1 {offsets = [2, 0, 1, 1], sizes = [1, 4, 8, 8], strides = [1, 1, 1, 1]} : vector<4x4x9x9xbf16> to vector<1x4x8x8xbf16>
    %45 = vector.shape_cast %44 : vector<1x4x8x8xbf16> to vector<4x8x8xbf16>
    %46 = vector.shape_cast %45 : vector<4x8x8xbf16> to vector<4x64xbf16>
    %47 = vector.extract_strided_slice %1 {offsets = [3, 0, 1, 1], sizes = [1, 4, 8, 8], strides = [1, 1, 1, 1]} : vector<4x4x9x9xbf16> to vector<1x4x8x8xbf16>
    %48 = vector.shape_cast %47 : vector<1x4x8x8xbf16> to vector<4x8x8xbf16>
    %49 = vector.shape_cast %48 : vector<4x8x8xbf16> to vector<4x64xbf16>
    %50 = tpu.concatenate %4, %7, %10, %13, %16, %19, %22, %25, %28, %31, %34, %37, %40, %43, %46, %49 in 0 : vector<4x64xbf16>, vector<4x64xbf16>, vector<4x64xbf16>, vector<4x64xbf16>, vector<4x64xbf16>, vector<4x64xbf16>, vector<4x64xbf16>, vector<4x64xbf16>, vector<4x64xbf16>, vector<4x64xbf16>, vector<4x64xbf16>, vector<4x64xbf16>, vector<4x64xbf16>, vector<4x64xbf16>, vector<4x64xbf16>, vector<4x64xbf16> -> vector<64x64xbf16>
    %c0_4 = arith.constant 0 : index
    %c0_5 = arith.constant 0 : index
    %51 = vector.load %arg3[%c0_4, %c0_5] : memref<8x64xbf16, #tpu.memory_space<vmem>>, vector<8x64xbf16>
    %cst = arith.constant dense<0.000000e+00> : vector<8x64xf32>
    %52 = tpu.matmul %51, %50, %cst {dimension_numbers = #tpu.dot_dimension_numbers<[1], [0], [0], [1], [0, 0, 1, 1], [], []>} : vector<8x64xbf16>, vector<64x64xbf16>, vector<8x64xf32> -> vector<8x64xf32>
    %cst_6 = arith.constant dense<0.000000e+00> : vector<8xf32>
    %53 = vector.multi_reduction <add>, %52, %cst_6 [1] : vector<8x64xf32> to vector<8xf32>
    %54 = vector.shape_cast %53 : vector<8xf32> to vector<8x1xf32>
    %cst_7 = arith.constant 1.562500e-02 : f32
    %55 = vector.broadcast %cst_7 : f32 to vector<8x1xf32>
    %56 = arith.mulf %54, %55 : vector<8x1xf32>
    %57 = arith.mulf %52, %52 : vector<8x64xf32>
    %cst_8 = arith.constant dense<0.000000e+00> : vector<8xf32>
    %58 = vector.multi_reduction <add>, %57, %cst_8 [1] : vector<8x64xf32> to vector<8xf32>
    %59 = vector.shape_cast %58 : vector<8xf32> to vector<8x1xf32>
    %cst_9 = arith.constant 1.562500e-02 : f32
    %60 = vector.broadcast %cst_9 : f32 to vector<8x1xf32>
    %61 = arith.mulf %59, %60 : vector<8x1xf32>
    %62 = arith.mulf %56, %56 : vector<8x1xf32>
    %63 = arith.subf %61, %62 : vector<8x1xf32>
    %cst_10 = arith.constant 9.99999974E-6 : f32
    %64 = vector.broadcast %cst_10 : f32 to vector<8x1xf32>
    %65 = arith.addf %63, %64 : vector<8x1xf32>
    %66 = math.rsqrt %65 : vector<8x1xf32>
    %67 = vector.broadcast %66 : vector<8x1xf32> to vector<8x64xf32>
    %68 = arith.mulf %52, %67 : vector<8x64xf32>
    %69 = arith.mulf %56, %66 : vector<8x1xf32>
    %70 = vector.broadcast %69 : vector<8x1xf32> to vector<8x64xf32>
    %71 = arith.subf %68, %70 : vector<8x64xf32>
    %cst_11 = arith.constant 0.000000e+00 : f32
    %72 = vector.broadcast %cst_11 : f32 to vector<8x64xf32>
    %73 = arith.cmpf oge, %71, %72 : vector<8x64xf32>
    %cst_12 = arith.constant 2.000000e-01 : f32
    %74 = vector.broadcast %cst_12 : f32 to vector<8x64xf32>
    %75 = arith.mulf %74, %71 : vector<8x64xf32>
    %76 = arith.select %73, %71, %75 : vector<8x64xi1>, vector<8x64xf32>
    %c0_13 = arith.constant 0 : index
    %c0_14 = arith.constant 0 : index
    %c0_15 = arith.constant 0 : index
    %77 = vector.load %arg4[%c0_13, %c0_14, %c0_15] : memref<1x8x64xf32, #tpu.memory_space<vmem>>, vector<1x8x64xf32>
    %78 = vector.shape_cast %77 : vector<1x8x64xf32> to vector<8x64xf32>
    %79 = vector.shape_cast %76 : vector<8x64xf32> to vector<1x8x64xf32>
    tpu.vector_store %arg4[%c0_13, %c0_14, %c0_15], %79 {strides = array<i32>} : memref<1x8x64xf32, #tpu.memory_space<vmem>>, vector<1x8x64xf32>,
    return
  }
  func.func @transform_0(%arg0: i32, %arg1: i32) -> (i32, i32, i32, i32, i32) {
    %c0_i32 = arith.constant 0 : i32
    %c0_i32_0 = arith.constant 0 : i32
    %c0_i32_1 = arith.constant 0 : i32
    %c0_i32_2 = arith.constant 0 : i32
    %c0_i32_3 = arith.constant 0 : i32
    return %arg0, %c0_i32, %c0_i32_0, %c0_i32_1, %c0_i32_2 : i32, i32, i32, i32, i32
  }
  func.func @transform_1(%arg0: i32, %arg1: i32) -> (i32, i32) {
    %c0_i32 = arith.constant 0 : i32
    %c0_i32_0 = arith.constant 0 : i32
    return %arg1, %c0_i32 : i32, i32
  }
  func.func @transform_2(%arg0: i32, %arg1: i32) -> (i32, i32, i32) {
    %c0_i32 = arith.constant 0 : i32
    %c0_i32_0 = arith.constant 0 : i32
    return %arg0, %arg1, %c0_i32 : i32, i32, i32
  }
}

</mosaic_0001>

<llo_original>
// kernel: unet_down.1
$region0: #{unet_down.1}
  #allocation0 [shape = 'u32[]', space=smem, size = 0x4, offset = 0x4, fixed_abs, tag = 'smem constant byte address 0x4 - core index']
  #allocation1 [shape = 'u32[72,128]{1,0:T(1,128)}', space=vmem, size = 0x9000, scoped, tag = 'internal scratch']
  %s0 = inlined_call_operand.vmem [shape: bf16[2,4,4,9,9], index: 0, kind: input, shape index: {}]
  %s1 = inlined_call_operand.vmem [shape: bf16[8,64], index: 1, kind: input, shape index: {}]
  %s2 = inlined_call_operand.vmem [shape: f32[2,8,64], index: 2, kind: output, shape index: {}]
  %s3 = sld [smem:[#allocation0]]
  $region41: #{unet_down.1} parent=0
    _
  %s5 = ssub.s32 1, %s3
  %s6 = scalar_select 0, %s5, %s3
  loop: start=0, step=1, limit=4
  $region2: #{unet_down.1} parent=0 // loop_pre_header
    _
  $region3: #{unet_down.1} parent=0 // loop_header
    %s8 = sphi 0, %s12
    %p9 = scmp.ge.s32.totalorder %s8, 4
    %s15 = sphi 0, %s27
    %s16 = sphi 0, %s23
    %s17 = sphi 0, %s15
    %s18 = sphi 0, %s16
    %s19 = sphi 0, %s17
    %s20 = sphi 0, %s18
    %s30 = sphi 0, %s32
    %s33 = sphi 0, %s30
    %s34 = sphi 0, %s33
    %s50 = sphi 0, %s34
    %s56 = sphi 0, %s58
    %s59 = sphi 0, %s56
    %s60 = sphi 0, %s59
    %s76 = sphi 0, %s60
    %s84 = sphi 0, %s86
    %s87 = sphi 0, %s84
    %s88 = sphi 0, %s87
    %s104 = sphi 0, %s88
  $region4: #{unet_down.1} parent=0 // loop_header_branch
    %11 = sbr.rel (%p9) target = $region8
  $region5: #{unet_down.1} parent=0 // loop_body
    %s13 = ssub.s32 %s8, 1
    %s14 = ssub.s32 %s8, 2
    %s21 = sadd.s32 1, %s16
    %p22 = scmp.ge.s32.totalorder %s21, 1
    %s23 = scalar_select %p22, 0, %s21
    %s24 = sadd.s32 1, %s15
    %s25 = scalar_select %p22, %s24, %s15
    %p26 = scmp.ge.s32.totalorder %s25, 2
    %s27 = scalar_select %p26, 0, %s25
    %s28 = ssub.s32 %s15, %s27
    %p29 = scmp.eq.s32.totalorder %s28, 0
    %s31 = sadd.s32 %s30, 1
    %s32 = scalar_select %p29, %s30, %s31
    %p35 = pneg %p29
    %p36 = scmp.eq.s32.totalorder %s8, 1
    %p37 = por %p35, %p36
    %p38 = scmp.ne.s32.totalorder %s30, %s33
    %p39 = scmp.eq.s32.totalorder %s8, 0
    %p40 = por %p38, %p39
    %p41 = scmp.ne.s32.totalorder %s30, %s33
    %p42 = scmp.eq.s32.totalorder %s13, 1
    %p43 = por %p41, %p42
    %p44 = scmp.ne.s32.totalorder %s33, %s34
    %p45 = scmp.eq.s32.totalorder %s13, 0
    %p46 = por %p44, %p45
    %p47 = scmp.ne.s32.totalorder %s33, %s34
    %p48 = scmp.eq.s32.totalorder %s14, 1
    %p49 = por %p47, %p48
    %p51 = scmp.ne.s32.totalorder %s34, %s50
    %p52 = scmp.eq.s32.totalorder %s14, 0
    %p53 = por %p51, %p52
    %s54 = ssub.s32 %s16, %s23
    %p55 = scmp.eq.s32.totalorder %s54, 0
    %s57 = sadd.s32 %s56, 1
    %s58 = scalar_select %p55, %s56, %s57
    %p61 = pneg %p55
    %p62 = scmp.eq.s32.totalorder %s8, 1
    %p63 = por %p61, %p62
    %p64 = scmp.ne.s32.totalorder %s56, %s59
    %p65 = scmp.eq.s32.totalorder %s8, 0
    %p66 = por %p64, %p65
    %p67 = scmp.ne.s32.totalorder %s56, %s59
    %p68 = scmp.eq.s32.totalorder %s13, 1
    %p69 = por %p67, %p68
    %p70 = scmp.ne.s32.totalorder %s59, %s60
    %p71 = scmp.eq.s32.totalorder %s13, 0
    %p72 = por %p70, %p71
    %p73 = scmp.ne.s32.totalorder %s59, %s60
    %p74 = scmp.eq.s32.totalorder %s14, 1
    %p75 = por %p73, %p74
    %p77 = scmp.ne.s32.totalorder %s60, %s76
    %p78 = scmp.eq.s32.totalorder %s14, 0
    %p79 = por %p77, %p78
    %s80 = ssub.s32 %s15, %s27
    %s81 = ssub.s32 %s16, %s23
    %s82 = sor.u32 %s80, %s81
    %p83 = scmp.eq.s32.totalorder %s82, 0
    %s85 = sadd.s32 %s84, 1
    %s86 = scalar_select %p83, %s84, %s85
    %p89 = pneg %p83
    %p90 = scmp.eq.s32.totalorder %s8, 1
    %p91 = por %p89, %p90
    %p92 = scmp.ne.s32.totalorder %s84, %s87
    %p93 = scmp.eq.s32.totalorder %s8, 0
    %p94 = por %p92, %p93
    %p95 = scmp.ne.s32.totalorder %s84, %s87
    %p96 = scmp.eq.s32.totalorder %s13, 1
    %p97 = por %p95, %p96
    %p98 = scmp.ne.s32.totalorder %s87, %s88
    %p99 = scmp.eq.s32.totalorder %s13, 0
    %p100 = por %p98, %p99
    %p101 = scmp.ne.s32.totalorder %s87, %s88
    %p102 = scmp.eq.s32.totalorder %s14, 1
    %p103 = por %p101, %p102
    %p105 = scmp.ne.s32.totalorder %s88, %s104
    %p106 = scmp.eq.s32.totalorder %s14, 0
    %p107 = por %p105, %p106
    %p108 = scmp.le.s32.totalorder 1, %s8
    %p109 = scmp.lt.s32.totalorder %s8, 3
    %p110 = pnand %p108, %p109
    %p111 = pneg %p110
    // Predicated region
    $region9: #{unet_down.1} parent=5 // pred_check
      _
    $region10: #{unet_down.1} parent=5 // pred_check_branch
      %113 = sbr.rel (%p110) target = $region12
    $region11: #{unet_down.1} parent=5 // pred_region
      %s114 = ssub.s32 %s8, 1
      // Predicated region
      $region13: #{unet_down.1} parent=11 // pred_check
        %p115 = pneg %p72
      $region14: #{unet_down.1} parent=11 // pred_check_branch
        %117 = sbr.rel (%p115) target = $region16
      $region15: #{unet_down.1} parent=11 // pred_region
        %p118 = scmp.lt.s32.totalorder %s18, 0
        %s119 = scalar_select %p118, %s18, 0
        %s120 = smul.addr %s119, 4
        %s121 = scalar_lea.vmem %s1, %s120
      $region16: #{unet_down.1} parent=11 // pred_fallthru
        _
    $region12: #{unet_down.1} parent=5 // pred_fallthru
      _
    %p122 = scmp.lt.s32.totalorder %s8, 2
    // Predicated region
    $region17: #{unet_down.1} parent=5 // pred_check
      %p123 = pneg %p122
    $region18: #{unet_down.1} parent=5 // pred_check_branch
      %125 = sbr.rel (%p123) target = $region20
    $region19: #{unet_down.1} parent=5 // pred_region
      // Predicated region
      $region21: #{unet_down.1} parent=19 // pred_check
        %p126 = pneg %p40
      $region22: #{unet_down.1} parent=19 // pred_check_branch
        %128 = sbr.rel (%p126) target = $region24
      $region23: #{unet_down.1} parent=19 // pred_region
        %p129 = scmp.lt.s32.totalorder %s15, 1
        %s130 = scalar_select %p129, %s15, 1
        %s131 = smul.addr %s130, 32
        %s132 = smul.addr %s131, 4
        %s133 = scalar_lea.vmem %s0, %s132
      $region24: #{unet_down.1} parent=19 // pred_fallthru
        _
    $region20: #{unet_down.1} parent=5 // pred_fallthru
      _
    %p134 = scmp.le.s32.totalorder 1, %s8
    %p135 = scmp.lt.s32.totalorder %s8, 3
    %p136 = pnand %p134, %p135
    %p137 = pneg %p136
    // Predicated region
    $region25: #{unet_down.1} parent=5 // pred_check
      _
    $region26: #{unet_down.1} parent=5 // pred_check_branch
      %139 = sbr.rel (%p136) target = $region28
    $region27: #{unet_down.1} parent=5 // pred_region
      %s140 = ssub.s32 %s8, 1
      %p141 = scmp.lt.s32.totalorder %s17, 1
      %s142 = scalar_select %p141, %s17, 1
      %s143 = smul.addr %s142, 32
      %s144 = smul.addr %s143, 4
      %s145 = scalar_lea.vmem %s0, %s144
      %p146 = pneg %p46
      %p147 = pneg %p43
      %p148 = scmp.lt.s32.totalorder %s18, 0
      %s149 = scalar_select %p148, %s18, 0
      %s150 = smul.addr %s149, 4
      %s151 = scalar_lea.vmem %s1, %s150
      %p152 = pneg %p72
      %p153 = pneg %p69
      %p154 = pneg %p100
      %p155 = pneg %p97
      %p156 = scmp.lt.s32.totalorder %s17, 1
      %s157 = scalar_select %p156, %s17, 1
      %p158 = scmp.lt.s32.totalorder %s18, 0
      %s159 = scalar_select %p158, %s18, 0
      %s160 = sadd.s32 %s159, %s157
      %s161 = smul.addr %s160, 8
      %s162 = scalar_lea.vmem %s2, %s161
      %p163 = scmp.lt.s32.totalorder %s17, 1
      %s164 = scalar_select %p163, %s17, 1
      %s165 = smul.addr %s164, 32
      %s166 = smul.addr %s165, 4
      %s167 = scalar_lea.vmem %s0, %s166
      %p168 = scmp.lt.s32.totalorder %s18, 0
      %s169 = scalar_select %p168, %s18, 0
      %s170 = smul.addr %s169, 4
      %s171 = scalar_lea.vmem %s1, %s170
      %p172 = scmp.lt.s32.totalorder %s17, 1
      %s173 = scalar_select %p172, %s17, 1
      %p174 = scmp.lt.s32.totalorder %s18, 0
      %s175 = scalar_select %p174, %s18, 0
      %s176 = sadd.s32 %s175, %s173
      %s177 = smul.addr %s176, 8
      %s178 = scalar_lea.vmem %s2, %s177
      %v180 = vld [vmem:[%s167] sm:$0xf]
      %v181 = vld [vmem:[%s167 + $0x4] sm:$0x1]
      %v182 = vld [vmem:[%s167 + $0x8] sm:$0xf]
      %v183 = vld [vmem:[%s167 + $0xc] sm:$0x1]
      %v184 = vld [vmem:[%s167 + $0x10] sm:$0xf]
      %v185 = vld [vmem:[%s167 + $0x14] sm:$0x1]
      %v186 = vld [vmem:[%s167 + $0x18] sm:$0xf]
      %v187 = vld [vmem:[%s167 + $0x1c] sm:$0x1]
      %v188 = vld [vmem:[%s167 + $0x20] sm:$0xf]
      %v189 = vld [vmem:[%s167 + $0x24] sm:$0x1]
      %v190 = vld [vmem:[%s167 + $0x28] sm:$0xf]
      %v191 = vld [vmem:[%s167 + $0x2c] sm:$0x1]
      %v192 = vld [vmem:[%s167 + $0x30] sm:$0xf]
      %v193 = vld [vmem:[%s167 + $0x34] sm:$0x1]
      %v194 = vld [vmem:[%s167 + $0x38] sm:$0xf]
      %v195 = vld [vmem:[%s167 + $0x3c] sm:$0x1]
      %v196 = vld [vmem:[%s167 + $0x40] sm:$0xf]
      %v197 = vld [vmem:[%s167 + $0x44] sm:$0x1]
      %v198 = vld [vmem:[%s167 + $0x48] sm:$0xf]
      %v199 = vld [vmem:[%s167 + $0x4c] sm:$0x1]
      %v200 = vld [vmem:[%s167 + $0x50] sm:$0xf]
      %v201 = vld [vmem:[%s167 + $0x54] sm:$0x1]
      %v202 = vld [vmem:[%s167 + $0x58] sm:$0xf]
      %v203 = vld [vmem:[%s167 + $0x5c] sm:$0x1]
      %v204 = vld [vmem:[%s167 + $0x60] sm:$0xf]
      %v205 = vld [vmem:[%s167 + $0x64] sm:$0x1]
      %v206 = vld [vmem:[%s167 + $0x68] sm:$0xf]
      %v207 = vld [vmem:[%s167 + $0x6c] sm:$0x1]
      %v208 = vld [vmem:[%s167 + $0x70] sm:$0xf]
      %v209 = vld [vmem:[%s167 + $0x74] sm:$0x1]
      %v210 = vld [vmem:[%s167 + $0x78] sm:$0xf]
      %v211 = vld [vmem:[%s167 + $0x7c] sm:$0x1]
      %v214 = vpack.i.b16 %v182, %v180
      %v215 = vshrl.u32 %v180, 16
      %v216 = vshrl.u32 %v182, 16
      %v217 = vpack.i.b16 %v216, %v215
      %v220 = vpack.i.b16 %v186, %v184
      %v221 = vshrl.u32 %v184, 16
      %v222 = vshrl.u32 %v186, 16
      %v223 = vpack.i.b16 %v222, %v221
      %v226 = vunpack.c.l.s4 1983009808
      %v227 = vunpack.c.0.s8 %v226
      %v228 = vperm.slane %v214, %v227
      %v231 = vunpack.c.l.s4 1983009808
      %v232 = vunpack.c.0.s8 %v231
      %v233 = vperm.slane %v220, %v232
      %v234 = vrot.slane %v233, 4
      %vm235 = vcmask 1047556
      %v236 = vsel %vm235, %v234, %v228
      %v237 = vrot.slane %v228, 4
      %v238 = vsel %vm235, %v233, %v237
      %v240 = vunpack.c.l.s4 1934713408
      %v241 = vunpack.c.0.s8 %v240
      %v242 = vperm.slane %v236, %v241
      %v244 = vunpack.c.l.s4 1934713408
      %v245 = vunpack.c.0.s8 %v244
      %v246 = vperm.slane %v238, %v245
      %v247 = vrot.slane %v242, 4
      %v248 = vsel %vm235, 0, %v247
      %v249 = vrot.slane %v246, 4
      %v250 = vsel %vm235, 0, %v249
      %v253 = vunpack.c.l.s4 1983009808
      %v254 = vunpack.c.0.s8 %v253
      %v255 = vperm.slane %v217, %v254
      %v258 = vunpack.c.l.s4 1983009808
      %v259 = vunpack.c.0.s8 %v258
      %v260 = vperm.slane %v223, %v259
      %v261 = vrot.slane %v260, 4
      %v262 = vsel %vm235, %v261, %v255
      %v263 = vrot.slane %v255, 4
      %v264 = vsel %vm235, %v260, %v263
      %v266 = vunpack.c.l.s4 1934713408
      %v267 = vunpack.c.0.s8 %v266
      %v268 = vperm.slane %v262, %v267
      %v270 = vunpack.c.l.s4 1934713408
      %v271 = vunpack.c.0.s8 %v270
      %v272 = vperm.slane %v264, %v271
      %v273 = vrot.slane %v268, 4
      %v274 = vsel %vm235, 0, %v273
      %v275 = vrot.slane %v272, 4
      %v276 = vsel %vm235, 0, %v275
      %v278 = vunpack.c.l.b16 %v268
      %v279 = vpack.c.b16 %v278, %v278
      %280 = vrot.lane.b32.xlu0 %v279, 8
      %v281 = vpop.permute.xlu0 %280
      %v283 = vunpack.c.l.b16 %v248
      %v284 = vpack.c.b16 %v283, %v283
      %285 = vrot.lane.b32.xlu0 %v284, 16
      %v286 = vpop.permute.xlu0 %285
      %v288 = vunpack.c.l.b16 %v274
      %v289 = vpack.c.b16 %v288, %v288
      %290 = vrot.lane.b32.xlu0 %v289, 24
      %v291 = vpop.permute.xlu0 %290
      %v293 = vunpack.c.l.b16 %v246
      %v294 = vpack.c.b16 %v293, %v293
      %295 = vrot.lane.b32.xlu0 %v294, 32
      %v296 = vpop.permute.xlu0 %295
      %v298 = vunpack.c.l.b16 %v272
      %v299 = vpack.c.b16 %v298, %v298
      %300 = vrot.lane.b32.xlu0 %v299, 40
      %v301 = vpop.permute.xlu0 %300
      %v303 = vunpack.c.l.b16 %v250
      %v304 = vpack.c.b16 %v303, %v303
      %305 = vrot.lane.b32.xlu0 %v304, 48
      %v306 = vpop.permute.xlu0 %305
      %v308 = vunpack.c.l.b16 %v276
      %v309 = vpack.c.b16 %v308, %v308
      %310 = vrot.lane.b32.xlu0 %v309, 56
      %v311 = vpop.permute.xlu0 %310
      %vm312 = vcmask 64512
      %v315 = vsel %vm312, %v242, %v281
      %vm316 = vcmask 130048
      %v318 = vsel %vm316, %v315, %v286
      %vm319 = vcmask 195584
      %v321 = vsel %vm319, %v318, %v291
      %vm322 = vcmask 261120
      %v324 = vsel %vm322, %v321, %v296
      %vm325 = vcmask 326656
      %v327 = vsel %vm325, %v324, %v301
      %vm328 = vcmask 392192
      %v330 = vsel %vm328, %v327, %v306
      %vm331 = vcmask 457728
      %v333 = vsel %vm331, %v330, %v311
      %v336 = vpack.i.b16 %v190, %v188
      %v337 = vshrl.u32 %v188, 16
      %v338 = vshrl.u32 %v190, 16
      %v339 = vpack.i.b16 %v338, %v337
      %v342 = vpack.i.b16 %v194, %v192
      %v343 = vshrl.u32 %v192, 16
      %v344 = vshrl.u32 %v194, 16
      %v345 = vpack.i.b16 %v344, %v343
      %v348 = vunpack.c.l.s4 1983009808
      %v349 = vunpack.c.0.s8 %v348
      %v350 = vperm.slane %v336, %v349
      %v353 = vunpack.c.l.s4 1983009808
      %v354 = vunpack.c.0.s8 %v353
      %v355 = vperm.slane %v342, %v354
      %v356 = vrot.slane %v355, 4
      %v357 = vsel %vm235, %v356, %v350
      %v358 = vrot.slane %v350, 4
      %v359 = vsel %vm235, %v355, %v358
      %v361 = vunpack.c.l.s4 1934713408
      %v362 = vunpack.c.0.s8 %v361
      %v363 = vperm.slane %v357, %v362
      %v365 = vunpack.c.l.s4 1934713408
      %v366 = vunpack.c.0.s8 %v365
      %v367 = vperm.slane %v359, %v366
      %v368 = vrot.slane %v363, 4
      %v369 = vsel %vm235, 0, %v368
      %v370 = vrot.slane %v367, 4
      %v371 = vsel %vm235, 0, %v370
      %v374 = vunpack.c.l.s4 1983009808
      %v375 = vunpack.c.0.s8 %v374
      %v376 = vperm.slane %v339, %v375
      %v379 = vunpack.c.l.s4 1983009808
      %v380 = vunpack.c.0.s8 %v379
      %v381 = vperm.slane %v345, %v380
      %v382 = vrot.slane %v381, 4
      %v383 = vsel %vm235, %v382, %v376
      %v384 = vrot.slane %v376, 4
      %v385 = vsel %vm235, %v381, %v384
      %v387 = vunpack.c.l.s4 1934713408
      %v388 = vunpack.c.0.s8 %v387
      %v389 = vperm.slane %v383, %v388
      %v391 = vunpack.c.l.s4 1934713408
      %v392 = vunpack.c.0.s8 %v391
      %v393 = vperm.slane %v385, %v392
      %v394 = vrot.slane %v389, 4
      %v395 = vsel %vm235, 0, %v394
      %v396 = vrot.slane %v393, 4
      %v397 = vsel %vm235, 0, %v396
      %v399 = vunpack.c.l.b16 %v389
      %v400 = vpack.c.b16 %v399, %v399
      %401 = vrot.lane.b32.xlu0 %v400, 8
      %v402 = vpop.permute.xlu0 %401
      %v404 = vunpack.c.l.b16 %v369
      %v405 = vpack.c.b16 %v404, %v404
      %406 = vrot.lane.b32.xlu0 %v405, 16
      %v407 = vpop.permute.xlu0 %406
      %v409 = vunpack.c.l.b16 %v395
      %v410 = vpack.c.b16 %v409, %v409
      %411 = vrot.lane.b32.xlu0 %v410, 24
      %v412 = vpop.permute.xlu0 %411
      %v414 = vunpack.c.l.b16 %v367
      %v415 = vpack.c.b16 %v414, %v414
      %416 = vrot.lane.b32.xlu0 %v415, 32
      %v417 = vpop.permute.xlu0 %416
      %v419 = vunpack.c.l.b16 %v393
      %v420 = vpack.c.b16 %v419, %v419
      %421 = vrot.lane.b32.xlu0 %v420, 40
      %v422 = vpop.permute.xlu0 %421
      %v424 = vunpack.c.l.b16 %v371
      %v425 = vpack.c.b16 %v424, %v424
      %426 = vrot.lane.b32.xlu0 %v425, 48
      %v427 = vpop.permute.xlu0 %426
      %v429 = vunpack.c.l.b16 %v397
      %v430 = vpack.c.b16 %v429, %v429
      %431 = vrot.lane.b32.xlu0 %v430, 56
      %v432 = vpop.permute.xlu0 %431
      %v435 = vsel %vm312, %v363, %v402
      %v437 = vsel %vm316, %v435, %v407
      %v439 = vsel %vm319, %v437, %v412
      %v441 = vsel %vm322, %v439, %v417
      %v443 = vsel %vm325, %v441, %v422
      %v445 = vsel %vm328, %v443, %v427
      %v447 = vsel %vm331, %v445, %v432
      %452 = vrot.lane.b32.xlu0 %v180, 127
      %v453 = vpop.permute.xlu0 %452
      %454 = vrot.lane.b32.xlu0 %v182, 127
      %v455 = vpop.permute.xlu0 %454
      %456 = vrot.lane.b32.xlu0 %v184, 127
      %v457 = vpop.permute.xlu0 %456
      %458 = vrot.lane.b32.xlu0 %v186, 127
      %v459 = vpop.permute.xlu0 %458
      %v462 = vpack.i.b16 %v455, %v453
      %v463 = vshrl.u32 %v453, 16
      %v464 = vshrl.u32 %v455, 16
      %v465 = vpack.i.b16 %v464, %v463
      %v468 = vpack.i.b16 %v459, %v457
      %v469 = vshrl.u32 %v457, 16
      %v470 = vshrl.u32 %v459, 16
      %v471 = vpack.i.b16 %v470, %v469
      %v474 = vunpack.c.l.s4 1983009808
      %v475 = vunpack.c.0.s8 %v474
      %v476 = vperm.slane %v462, %v475
      %v479 = vunpack.c.l.s4 1983009808
      %v480 = vunpack.c.0.s8 %v479
      %v481 = vperm.slane %v468, %v480
      %v482 = vrot.slane %v481, 4
      %v483 = vsel %vm235, %v482, %v476
      %v484 = vrot.slane %v476, 4
      %v485 = vsel %vm235, %v481, %v484
      %v487 = vunpack.c.l.s4 1934713408
      %v488 = vunpack.c.0.s8 %v487
      %v489 = vperm.slane %v483, %v488
      %v491 = vunpack.c.l.s4 1934713408
      %v492 = vunpack.c.0.s8 %v491
      %v493 = vperm.slane %v485, %v492
      %v494 = vrot.slane %v489, 4
      %v495 = vsel %vm235, 0, %v494
      %v496 = vrot.slane %v493, 4
      %v497 = vsel %vm235, 0, %v496
      %v500 = vunpack.c.l.s4 1983009808
      %v501 = vunpack.c.0.s8 %v500
      %v502 = vperm.slane %v465, %v501
      %v505 = vunpack.c.l.s4 1983009808
      %v506 = vunpack.c.0.s8 %v505
      %v507 = vperm.slane %v471, %v506
      %v508 = vrot.slane %v507, 4
      %v509 = vsel %vm235, %v508, %v502
      %v510 = vrot.slane %v502, 4
      %v511 = vsel %vm235, %v507, %v510
      %v513 = vunpack.c.l.s4 1934713408
      %v514 = vunpack.c.0.s8 %v513
      %v515 = vperm.slane %v509, %v514
      %v517 = vunpack.c.l.s4 1934713408
      %v518 = vunpack.c.0.s8 %v517
      %v519 = vperm.slane %v511, %v518
      %v520 = vrot.slane %v515, 4
      %v521 = vsel %vm235, 0, %v520
      %v522 = vrot.slane %v519, 4
      %v523 = vsel %vm235, 0, %v522
      %v525 = vunpack.c.l.b16 %v515
      %v526 = vpack.c.b16 %v525, %v525
      %527 = vrot.lane.b32.xlu0 %v526, 8
      %v528 = vpop.permute.xlu0 %527
      %v530 = vunpack.c.l.b16 %v495
      %v531 = vpack.c.b16 %v530, %v530
      %532 = vrot.lane.b32.xlu0 %v531, 16
      %v533 = vpop.permute.xlu0 %532
      %v535 = vunpack.c.l.b16 %v521
      %v536 = vpack.c.b16 %v535, %v535
      %537 = vrot.lane.b32.xlu0 %v536, 24
      %v538 = vpop.permute.xlu0 %537
      %v540 = vunpack.c.l.b16 %v493
      %v541 = vpack.c.b16 %v540, %v540
      %542 = vrot.lane.b32.xlu0 %v541, 32
      %v543 = vpop.permute.xlu0 %542
      %v545 = vunpack.c.l.b16 %v519
      %v546 = vpack.c.b16 %v545, %v545
      %547 = vrot.lane.b32.xlu0 %v546, 40
      %v548 = vpop.permute.xlu0 %547
      %v550 = vunpack.c.l.b16 %v497
      %v551 = vpack.c.b16 %v550, %v550
      %552 = vrot.lane.b32.xlu0 %v551, 48
      %v553 = vpop.permute.xlu0 %552
      %v555 = vunpack.c.l.b16 %v523
      %v556 = vpack.c.b16 %v555, %v555
      %557 = vrot.lane.b32.xlu0 %v556, 56
      %v558 = vpop.permute.xlu0 %557
      %v561 = vsel %vm312, %v489, %v528
      %v563 = vsel %vm316, %v561, %v533
      %v565 = vsel %vm319, %v563, %v538
      %v567 = vsel %vm322, %v565, %v543
      %v569 = vsel %vm325, %v567, %v548
      %v571 = vsel %vm328, %v569, %v553
      %v573 = vsel %vm331, %v571, %v558
      %578 = vrot.lane.b32.xlu0 %v188, 127
      %v579 = vpop.permute.xlu0 %578
      %580 = vrot.lane.b32.xlu0 %v190, 127
      %v581 = vpop.permute.xlu0 %580
      %582 = vrot.lane.b32.xlu0 %v192, 127
      %v583 = vpop.permute.xlu0 %582
      %584 = vrot.lane.b32.xlu0 %v194, 127
      %v585 = vpop.permute.xlu0 %584
      %v588 = vpack.i.b16 %v581, %v579
      %v589 = vshrl.u32 %v579, 16
      %v590 = vshrl.u32 %v581, 16
      %v591 = vpack.i.b16 %v590, %v589
      %v594 = vpack.i.b16 %v585, %v583
      %v595 = vshrl.u32 %v583, 16
      %v596 = vshrl.u32 %v585, 16
      %v597 = vpack.i.b16 %v596, %v595
      %v600 = vunpack.c.l.s4 1983009808
      %v601 = vunpack.c.0.s8 %v600
      %v602 = vperm.slane %v588, %v601
      %v605 = vunpack.c.l.s4 1983009808
      %v606 = vunpack.c.0.s8 %v605
      %v607 = vperm.slane %v594, %v606
      %v608 = vrot.slane %v607, 4
      %v609 = vsel %vm235, %v608, %v602
      %v610 = vrot.slane %v602, 4
      %v611 = vsel %vm235, %v607, %v610
      %v613 = vunpack.c.l.s4 1934713408
      %v614 = vunpack.c.0.s8 %v613
      %v615 = vperm.slane %v609, %v614
      %v617 = vunpack.c.l.s4 1934713408
      %v618 = vunpack.c.0.s8 %v617
      %v619 = vperm.slane %v611, %v618
      %v620 = vrot.slane %v615, 4
      %v621 = vsel %vm235, 0, %v620
      %v622 = vrot.slane %v619, 4
      %v623 = vsel %vm235, 0, %v622
      %v626 = vunpack.c.l.s4 1983009808
      %v627 = vunpack.c.0.s8 %v626
      %v628 = vperm.slane %v591, %v627
      %v631 = vunpack.c.l.s4 1983009808
      %v632 = vunpack.c.0.s8 %v631
      %v633 = vperm.slane %v597, %v632
      %v634 = vrot.slane %v633, 4
      %v635 = vsel %vm235, %v634, %v628
      %v636 = vrot.slane %v628, 4
      %v637 = vsel %vm235, %v633, %v636
      %v639 = vunpack.c.l.s4 1934713408
      %v640 = vunpack.c.0.s8 %v639
      %v641 = vperm.slane %v635, %v640
      %v643 = vunpack.c.l.s4 1934713408
      %v644 = vunpack.c.0.s8 %v643
      %v645 = vperm.slane %v637, %v644
      %v646 = vrot.slane %v641, 4
      %v647 = vsel %vm235, 0, %v646
      %v648 = vrot.slane %v645, 4
      %v649 = vsel %vm235, 0, %v648
      %v651 = vunpack.c.l.b16 %v641
      %v652 = vpack.c.b16 %v651, %v651
      %653 = vrot.lane.b32.xlu0 %v652, 8
      %v654 = vpop.permute.xlu0 %653
      %v656 = vunpack.c.l.b16 %v621
      %v657 = vpack.c.b16 %v656, %v656
      %658 = vrot.lane.b32.xlu0 %v657, 16
      %v659 = vpop.permute.xlu0 %658
      %v661 = vunpack.c.l.b16 %v647
      %v662 = vpack.c.b16 %v661, %v661
      %663 = vrot.lane.b32.xlu0 %v662, 24
      %v664 = vpop.permute.xlu0 %663
      %v666 = vunpack.c.l.b16 %v619
      %v667 = vpack.c.b16 %v666, %v666
      %668 = vrot.lane.b32.xlu0 %v667, 32
      %v669 = vpop.permute.xlu0 %668
      %v671 = vunpack.c.l.b16 %v645
      %v672 = vpack.c.b16 %v671, %v671
      %673 = vrot.lane.b32.xlu0 %v672, 40
      %v674 = vpop.permute.xlu0 %673
      %v676 = vunpack.c.l.b16 %v623
      %v677 = vpack.c.b16 %v676, %v676
      %678 = vrot.lane.b32.xlu0 %v677, 48
      %v679 = vpop.permute.xlu0 %678
      %v681 = vunpack.c.l.b16 %v649
      %v682 = vpack.c.b16 %v681, %v681
      %683 = vrot.lane.b32.xlu0 %v682, 56
      %v684 = vpop.permute.xlu0 %683
      %v687 = vsel %vm312, %v615, %v654
      %v689 = vsel %vm316, %v687, %v659
      %v691 = vsel %vm319, %v689, %v664
      %v693 = vsel %vm322, %v691, %v669
      %v695 = vsel %vm325, %v693, %v674
      %v697 = vsel %vm328, %v695, %v679
      %v699 = vsel %vm331, %v697, %v684
      %v702 = vpack.i.b16 %v198, %v196
      %v703 = vshrl.u32 %v196, 16
      %v704 = vshrl.u32 %v198, 16
      %v705 = vpack.i.b16 %v704, %v703
      %v708 = vpack.i.b16 %v202, %v200
      %v709 = vshrl.u32 %v200, 16
      %v710 = vshrl.u32 %v202, 16
      %v711 = vpack.i.b16 %v710, %v709
      %v714 = vunpack.c.l.s4 1983009808
      %v715 = vunpack.c.0.s8 %v714
      %v716 = vperm.slane %v702, %v715
      %v719 = vunpack.c.l.s4 1983009808
      %v720 = vunpack.c.0.s8 %v719
      %v721 = vperm.slane %v708, %v720
      %v722 = vrot.slane %v721, 4
      %v723 = vsel %vm235, %v722, %v716
      %v724 = vrot.slane %v716, 4
      %v725 = vsel %vm235, %v721, %v724
      %v727 = vunpack.c.l.s4 1934713408
      %v728 = vunpack.c.0.s8 %v727
      %v729 = vperm.slane %v723, %v728
      %v731 = vunpack.c.l.s4 1934713408
      %v732 = vunpack.c.0.s8 %v731
      %v733 = vperm.slane %v725, %v732
      %v734 = vrot.slane %v729, 4
      %v735 = vsel %vm235, 0, %v734
      %v736 = vrot.slane %v733, 4
      %v737 = vsel %vm235, 0, %v736
      %v740 = vunpack.c.l.s4 1983009808
      %v741 = vunpack.c.0.s8 %v740
      %v742 = vperm.slane %v705, %v741
      %v745 = vunpack.c.l.s4 1983009808
      %v746 = vunpack.c.0.s8 %v745
      %v747 = vperm.slane %v711, %v746
      %v748 = vrot.slane %v747, 4
      %v749 = vsel %vm235, %v748, %v742
      %v750 = vrot.slane %v742, 4
      %v751 = vsel %vm235, %v747, %v750
      %v753 = vunpack.c.l.s4 1934713408
      %v754 = vunpack.c.0.s8 %v753
      %v755 = vperm.slane %v749, %v754
      %v757 = vunpack.c.l.s4 1934713408
      %v758 = vunpack.c.0.s8 %v757
      %v759 = vperm.slane %v751, %v758
      %v760 = vrot.slane %v755, 4
      %v761 = vsel %vm235, 0, %v760
      %v762 = vrot.slane %v759, 4
      %v763 = vsel %vm235, 0, %v762
      %v765 = vunpack.c.l.b16 %v755
      %v766 = vpack.c.b16 %v765, %v765
      %767 = vrot.lane.b32.xlu0 %v766, 8
      %v768 = vpop.permute.xlu0 %767
      %v770 = vunpack.c.l.b16 %v735
      %v771 = vpack.c.b16 %v770, %v770
      %772 = vrot.lane.b32.xlu0 %v771, 16
      %v773 = vpop.permute.xlu0 %772
      %v775 = vunpack.c.l.b16 %v761
      %v776 = vpack.c.b16 %v775, %v775
      %777 = vrot.lane.b32.xlu0 %v776, 24
      %v778 = vpop.permute.xlu0 %777
      %v780 = vunpack.c.l.b16 %v733
      %v781 = vpack.c.b16 %v780, %v780
      %782 = vrot.lane.b32.xlu0 %v781, 32
      %v783 = vpop.permute.xlu0 %782
      %v785 = vunpack.c.l.b16 %v759
      %v786 = vpack.c.b16 %v785, %v785
      %787 = vrot.lane.b32.xlu0 %v786, 40
      %v788 = vpop.permute.xlu0 %787
      %v790 = vunpack.c.l.b16 %v737
      %v791 = vpack.c.b16 %v790, %v790
      %792 = vrot.lane.b32.xlu0 %v791, 48
      %v793 = vpop.permute.xlu0 %792
      %v795 = vunpack.c.l.b16 %v763
      %v796 = vpack.c.b16 %v795, %v795
      %797 = vrot.lane.b32.xlu0 %v796, 56
      %v798 = vpop.permute.xlu0 %797
      %v801 = vsel %vm312, %v729, %v768
      %v803 = vsel %vm316, %v801, %v773
      %v805 = vsel %vm319, %v803, %v778
      %v807 = vsel %vm322, %v805, %v783
      %v809 = vsel %vm325, %v807, %v788
      %v811 = vsel %vm328, %v809, %v793
      %v813 = vsel %vm331, %v811, %v798
      %v816 = vpack.i.b16 %v206, %v204
      %v817 = vshrl.u32 %v204, 16
      %v818 = vshrl.u32 %v206, 16
      %v819 = vpack.i.b16 %v818, %v817
      %v822 = vpack.i.b16 %v210, %v208
      %v823 = vshrl.u32 %v208, 16
      %v824 = vshrl.u32 %v210, 16
      %v825 = vpack.i.b16 %v824, %v823
      %v828 = vunpack.c.l.s4 1983009808
      %v829 = vunpack.c.0.s8 %v828
      %v830 = vperm.slane %v816, %v829
      %v833 = vunpack.c.l.s4 1983009808
      %v834 = vunpack.c.0.s8 %v833
      %v835 = vperm.slane %v822, %v834
      %v836 = vrot.slane %v835, 4
      %v837 = vsel %vm235, %v836, %v830
      %v838 = vrot.slane %v830, 4
      %v839 = vsel %vm235, %v835, %v838
      %v841 = vunpack.c.l.s4 1934713408
      %v842 = vunpack.c.0.s8 %v841
      %v843 = vperm.slane %v837, %v842
      %v845 = vunpack.c.l.s4 1934713408
      %v846 = vunpack.c.0.s8 %v845
      %v847 = vperm.slane %v839, %v846
      %v848 = vrot.slane %v843, 4
      %v849 = vsel %vm235, 0, %v848
      %v850 = vrot.slane %v847, 4
      %v851 = vsel %vm235, 0, %v850
      %v854 = vunpack.c.l.s4 1983009808
      %v855 = vunpack.c.0.s8 %v854
      %v856 = vperm.slane %v819, %v855
      %v859 = vunpack.c.l.s4 1983009808
      %v860 = vunpack.c.0.s8 %v859
      %v861 = vperm.slane %v825, %v860
      %v862 = vrot.slane %v861, 4
      %v863 = vsel %vm235, %v862, %v856
      %v864 = vrot.slane %v856, 4
      %v865 = vsel %vm235, %v861, %v864
      %v867 = vunpack.c.l.s4 1934713408
      %v868 = vunpack.c.0.s8 %v867
      %v869 = vperm.slane %v863, %v868
      %v871 = vunpack.c.l.s4 1934713408
      %v872 = vunpack.c.0.s8 %v871
      %v873 = vperm.slane %v865, %v872
      %v874 = vrot.slane %v869, 4
      %v875 = vsel %vm235, 0, %v874
      %v876 = vrot.slane %v873, 4
      %v877 = vsel %vm235, 0, %v876
      %v879 = vunpack.c.l.b16 %v869
      %v880 = vpack.c.b16 %v879, %v879
      %881 = vrot.lane.b32.xlu0 %v880, 8
      %v882 = vpop.permute.xlu0 %881
      %v884 = vunpack.c.l.b16 %v849
      %v885 = vpack.c.b16 %v884, %v884
      %886 = vrot.lane.b32.xlu0 %v885, 16
      %v887 = vpop.permute.xlu0 %886
      %v889 = vunpack.c.l.b16 %v875
      %v890 = vpack.c.b16 %v889, %v889
      %891 = vrot.lane.b32.xlu0 %v890, 24
      %v892 = vpop.permute.xlu0 %891
      %v894 = vunpack.c.l.b16 %v847
      %v895 = vpack.c.b16 %v894, %v894
      %896 = vrot.lane.b32.xlu0 %v895, 32
      %v897 = vpop.permute.xlu0 %896
      %v899 = vunpack.c.l.b16 %v873
      %v900 = vpack.c.b16 %v899, %v899
      %901 = vrot.lane.b32.xlu0 %v900, 40
      %v902 = vpop.permute.xlu0 %901
      %v904 = vunpack.c.l.b16 %v851
      %v905 = vpack.c.b16 %v904, %v904
      %906 = vrot.lane.b32.xlu0 %v905, 48
      %v907 = vpop.permute.xlu0 %906
      %v909 = vunpack.c.l.b16 %v877
      %v910 = vpack.c.b16 %v909, %v909
      %911 = vrot.lane.b32.xlu0 %v910, 56
      %v912 = vpop.permute.xlu0 %911
      %v915 = vsel %vm312, %v843, %v882
      %v917 = vsel %vm316, %v915, %v887
      %v919 = vsel %vm319, %v917, %v892
      %v921 = vsel %vm322, %v919, %v897
      %v923 = vsel %vm325, %v921, %v902
      %v925 = vsel %vm328, %v923, %v907
      %v927 = vsel %vm331, %v925, %v912
      %932 = vrot.lane.b32.xlu0 %v196, 127
      %v933 = vpop.permute.xlu0 %932
      %934 = vrot.lane.b32.xlu0 %v198, 127
      %v935 = vpop.permute.xlu0 %934
      %936 = vrot.lane.b32.xlu0 %v200, 127
      %v937 = vpop.permute.xlu0 %936
      %938 = vrot.lane.b32.xlu0 %v202, 127
      %v939 = vpop.permute.xlu0 %938
      %v942 = vpack.i.b16 %v935, %v933
      %v943 = vshrl.u32 %v933, 16
      %v944 = vshrl.u32 %v935, 16
      %v945 = vpack.i.b16 %v944, %v943
      %v948 = vpack.i.b16 %v939, %v937
      %v949 = vshrl.u32 %v937, 16
      %v950 = vshrl.u32 %v939, 16
      %v951 = vpack.i.b16 %v950, %v949
      %v954 = vunpack.c.l.s4 1983009808
      %v955 = vunpack.c.0.s8 %v954
      %v956 = vperm.slane %v942, %v955
      %v959 = vunpack.c.l.s4 1983009808
      %v960 = vunpack.c.0.s8 %v959
      %v961 = vperm.slane %v948, %v960
      %v962 = vrot.slane %v961, 4
      %v963 = vsel %vm235, %v962, %v956
      %v964 = vrot.slane %v956, 4
      %v965 = vsel %vm235, %v961, %v964
      %v967 = vunpack.c.l.s4 1934713408
      %v968 = vunpack.c.0.s8 %v967
      %v969 = vperm.slane %v963, %v968
      %v971 = vunpack.c.l.s4 1934713408
      %v972 = vunpack.c.0.s8 %v971
      %v973 = vperm.slane %v965, %v972
      %v974 = vrot.slane %v969, 4
      %v975 = vsel %vm235, 0, %v974
      %v976 = vrot.slane %v973, 4
      %v977 = vsel %vm235, 0, %v976
      %v980 = vunpack.c.l.s4 1983009808
      %v981 = vunpack.c.0.s8 %v980
      %v982 = vperm.slane %v945, %v981
      %v985 = vunpack.c.l.s4 1983009808
      %v986 = vunpack.c.0.s8 %v985
      %v987 = vperm.slane %v951, %v986
      %v988 = vrot.slane %v987, 4
      %v989 = vsel %vm235, %v988, %v982
      %v990 = vrot.slane %v982, 4
      %v991 = vsel %vm235, %v987, %v990
      %v993 = vunpack.c.l.s4 1934713408
      %v994 = vunpack.c.0.s8 %v993
      %v995 = vperm.slane %v989, %v994
      %v997 = vunpack.c.l.s4 1934713408
      %v998 = vunpack.c.0.s8 %v997
      %v999 = vperm.slane %v991, %v998
      %v1000 = vrot.slane %v995, 4
      %v1001 = vsel %vm235, 0, %v1000
      %v1002 = vrot.slane %v999, 4
      %v1003 = vsel %vm235, 0, %v1002
      %v1005 = vunpack.c.l.b16 %v995
      %v1006 = vpack.c.b16 %v1005, %v1005
      %1007 = vrot.lane.b32.xlu0 %v1006, 8
      %v1008 = vpop.permute.xlu0 %1007
      %v1010 = vunpack.c.l.b16 %v975
      %v1011 = vpack.c.b16 %v1010, %v1010
      %1012 = vrot.lane.b32.xlu0 %v1011, 16
      %v1013 = vpop.permute.xlu0 %1012
      %v1015 = vunpack.c.l.b16 %v1001
      %v1016 = vpack.c.b16 %v1015, %v1015
      %1017 = vrot.lane.b32.xlu0 %v1016, 24
      %v1018 = vpop.permute.xlu0 %1017
      %v1020 = vunpack.c.l.b16 %v973
      %v1021 = vpack.c.b16 %v1020, %v1020
      %1022 = vrot.lane.b32.xlu0 %v1021, 32
      %v1023 = vpop.permute.xlu0 %1022
      %v1025 = vunpack.c.l.b16 %v999
      %v1026 = vpack.c.b16 %v1025, %v1025
      %1027 = vrot.lane.b32.xlu0 %v1026, 40
      %v1028 = vpop.permute.xlu0 %1027
      %v1030 = vunpack.c.l.b16 %v977
      %v1031 = vpack.c.b16 %v1030, %v1030
      %1032 = vrot.lane.b32.xlu0 %v1031, 48
      %v1033 = vpop.permute.xlu0 %1032
      %v1035 = vunpack.c.l.b16 %v1003
      %v1036 = vpack.c.b16 %v1035, %v1035
      %1037 = vrot.lane.b32.xlu0 %v1036, 56
      %v1038 = vpop.permute.xlu0 %1037
      %v1041 = vsel %vm312, %v969, %v1008
      %v1043 = vsel %vm316, %v1041, %v1013
      %v1045 = vsel %vm319, %v1043, %v1018
      %v1047 = vsel %vm322, %v1045, %v1023
      %v1049 = vsel %vm325, %v1047, %v1028
      %v1051 = vsel %vm328, %v1049, %v1033
      %v1053 = vsel %vm331, %v1051, %v1038
      %1058 = vrot.lane.b32.xlu0 %v204, 127
      %v1059 = vpop.permute.xlu0 %1058
      %1060 = vrot.lane.b32.xlu0 %v206, 127
      %v1061 = vpop.permute.xlu0 %1060
      %1062 = vrot.lane.b32.xlu0 %v208, 127
      %v1063 = vpop.permute.xlu0 %1062
      %1064 = vrot.lane.b32.xlu0 %v210, 127
      %v1065 = vpop.permute.xlu0 %1064
      %v1068 = vpack.i.b16 %v1061, %v1059
      %v1069 = vshrl.u32 %v1059, 16
      %v1070 = vshrl.u32 %v1061, 16
      %v1071 = vpack.i.b16 %v1070, %v1069
      %v1074 = vpack.i.b16 %v1065, %v1063
      %v1075 = vshrl.u32 %v1063, 16
      %v1076 = vshrl.u32 %v1065, 16
      %v1077 = vpack.i.b16 %v1076, %v1075
      %v1080 = vunpack.c.l.s4 1983009808
      %v1081 = vunpack.c.0.s8 %v1080
      %v1082 = vperm.slane %v1068, %v1081
      %v1085 = vunpack.c.l.s4 1983009808
      %v1086 = vunpack.c.0.s8 %v1085
      %v1087 = vperm.slane %v1074, %v1086
      %v1088 = vrot.slane %v1087, 4
      %v1089 = vsel %vm235, %v1088, %v1082
      %v1090 = vrot.slane %v1082, 4
      %v1091 = vsel %vm235, %v1087, %v1090
      %v1093 = vunpack.c.l.s4 1934713408
      %v1094 = vunpack.c.0.s8 %v1093
      %v1095 = vperm.slane %v1089, %v1094
      %v1097 = vunpack.c.l.s4 1934713408
      %v1098 = vunpack.c.0.s8 %v1097
      %v1099 = vperm.slane %v1091, %v1098
      %v1100 = vrot.slane %v1095, 4
      %v1101 = vsel %vm235, 0, %v1100
      %v1102 = vrot.slane %v1099, 4
      %v1103 = vsel %vm235, 0, %v1102
      %v1106 = vunpack.c.l.s4 1983009808
      %v1107 = vunpack.c.0.s8 %v1106
      %v1108 = vperm.slane %v1071, %v1107
      %v1111 = vunpack.c.l.s4 1983009808
      %v1112 = vunpack.c.0.s8 %v1111
      %v1113 = vperm.slane %v1077, %v1112
      %v1114 = vrot.slane %v1113, 4
      %v1115 = vsel %vm235, %v1114, %v1108
      %v1116 = vrot.slane %v1108, 4
      %v1117 = vsel %vm235, %v1113, %v1116
      %v1119 = vunpack.c.l.s4 1934713408
      %v1120 = vunpack.c.0.s8 %v1119
      %v1121 = vperm.slane %v1115, %v1120
      %v1123 = vunpack.c.l.s4 1934713408
      %v1124 = vunpack.c.0.s8 %v1123
      %v1125 = vperm.slane %v1117, %v1124
      %v1126 = vrot.slane %v1121, 4
      %v1127 = vsel %vm235, 0, %v1126
      %v1128 = vrot.slane %v1125, 4
      %v1129 = vsel %vm235, 0, %v1128
      %v1131 = vunpack.c.l.b16 %v1121
      %v1132 = vpack.c.b16 %v1131, %v1131
      %1133 = vrot.lane.b32.xlu0 %v1132, 8
      %v1134 = vpop.permute.xlu0 %1133
      %v1136 = vunpack.c.l.b16 %v1101
      %v1137 = vpack.c.b16 %v1136, %v1136
      %1138 = vrot.lane.b32.xlu0 %v1137, 16
      %v1139 = vpop.permute.xlu0 %1138
      %v1141 = vunpack.c.l.b16 %v1127
      %v1142 = vpack.c.b16 %v1141, %v1141
      %1143 = vrot.lane.b32.xlu0 %v1142, 24
      %v1144 = vpop.permute.xlu0 %1143
      %v1146 = vunpack.c.l.b16 %v1099
      %v1147 = vpack.c.b16 %v1146, %v1146
      %1148 = vrot.lane.b32.xlu0 %v1147, 32
      %v1149 = vpop.permute.xlu0 %1148
      %v1151 = vunpack.c.l.b16 %v1125
      %v1152 = vpack.c.b16 %v1151, %v1151
      %1153 = vrot.lane.b32.xlu0 %v1152, 40
      %v1154 = vpop.permute.xlu0 %1153
      %v1156 = vunpack.c.l.b16 %v1103
      %v1157 = vpack.c.b16 %v1156, %v1156
      %1158 = vrot.lane.b32.xlu0 %v1157, 48
      %v1159 = vpop.permute.xlu0 %1158
      %v1161 = vunpack.c.l.b16 %v1129
      %v1162 = vpack.c.b16 %v1161, %v1161
      %1163 = vrot.lane.b32.xlu0 %v1162, 56
      %v1164 = vpop.permute.xlu0 %1163
      %v1167 = vsel %vm312, %v1095, %v1134
      %v1169 = vsel %vm316, %v1167, %v1139
      %v1171 = vsel %vm319, %v1169, %v1144
      %v1173 = vsel %vm322, %v1171, %v1149
      %v1175 = vsel %vm325, %v1173, %v1154
      %v1177 = vsel %vm328, %v1175, %v1159
      %v1179 = vsel %vm331, %v1177, %v1164
      %vm1180 = vsmask.f32 3328
      %vm1181 = vsmask.f32 7440
      %vm1182 = vmor %vm1180, %vm1181
      %v1184 = vrot.slane %v215, 4
      %v1185 = vshll.u32 %v180, 16
      %v1187 = vrot.slane %v1185, 5
      %v1188 = vor.u32 %v1184, %v1187
      %v1189 = vrot.slane %v1188, 4
      %v1191 = vshll.u32 %v181, 16
      %v1193 = vrot.slane %v1191, 5
      %v1194 = vsel %vm1182, %v1189, %v1193
      %v1196 = vrot.slane %v216, 4
      %v1197 = vshll.u32 %v182, 16
      %v1199 = vrot.slane %v1197, 5
      %v1200 = vor.u32 %v1196, %v1199
      %v1201 = vrot.slane %v1200, 4
      %v1203 = vshll.u32 %v183, 16
      %v1205 = vrot.slane %v1203, 5
      %v1206 = vsel %vm1182, %v1201, %v1205
      %v1208 = vrot.slane %v221, 4
      %v1209 = vshll.u32 %v184, 16
      %v1211 = vrot.slane %v1209, 5
      %v1212 = vor.u32 %v1208, %v1211
      %v1213 = vrot.slane %v1212, 4
      %v1215 = vshll.u32 %v185, 16
      %v1217 = vrot.slane %v1215, 5
      %v1218 = vsel %vm1182, %v1213, %v1217
      %v1220 = vrot.slane %v222, 4
      %v1221 = vshll.u32 %v186, 16
      %v1223 = vrot.slane %v1221, 5
      %v1224 = vor.u32 %v1220, %v1223
      %v1225 = vrot.slane %v1224, 4
      %v1227 = vshll.u32 %v187, 16
      %v1229 = vrot.slane %v1227, 5
      %v1230 = vsel %vm1182, %v1225, %v1229
      %v1233 = vpack.i.b16 %v1206, %v1194
      %v1234 = vshrl.u32 %v1194, 16
      %v1235 = vshrl.u32 %v1206, 16
      %v1236 = vpack.i.b16 %v1235, %v1234
      %v1239 = vpack.i.b16 %v1230, %v1218
      %v1240 = vshrl.u32 %v1218, 16
      %v1241 = vshrl.u32 %v1230, 16
      %v1242 = vpack.i.b16 %v1241, %v1240
      %v1245 = vunpack.c.l.s4 1983009808
      %v1246 = vunpack.c.0.s8 %v1245
      %v1247 = vperm.slane %v1233, %v1246
      %v1250 = vunpack.c.l.s4 1983009808
      %v1251 = vunpack.c.0.s8 %v1250
      %v1252 = vperm.slane %v1239, %v1251
      %v1253 = vrot.slane %v1252, 4
      %v1254 = vsel %vm235, %v1253, %v1247
      %v1255 = vrot.slane %v1247, 4
      %v1256 = vsel %vm235, %v1252, %v1255
      %v1258 = vunpack.c.l.s4 1934713408
      %v1259 = vunpack.c.0.s8 %v1258
      %v1260 = vperm.slane %v1254, %v1259
      %v1262 = vunpack.c.l.s4 1934713408
      %v1263 = vunpack.c.0.s8 %v1262
      %v1264 = vperm.slane %v1256, %v1263
      %v1265 = vrot.slane %v1260, 4
      %v1266 = vsel %vm235, 0, %v1265
      %v1267 = vrot.slane %v1264, 4
      %v1268 = vsel %vm235, 0, %v1267
      %v1271 = vunpack.c.l.s4 1983009808
      %v1272 = vunpack.c.0.s8 %v1271
      %v1273 = vperm.slane %v1236, %v1272
      %v1276 = vunpack.c.l.s4 1983009808
      %v1277 = vunpack.c.0.s8 %v1276
      %v1278 = vperm.slane %v1242, %v1277
      %v1279 = vrot.slane %v1278, 4
      %v1280 = vsel %vm235, %v1279, %v1273
      %v1281 = vrot.slane %v1273, 4
      %v1282 = vsel %vm235, %v1278, %v1281
      %v1284 = vunpack.c.l.s4 1934713408
      %v1285 = vunpack.c.0.s8 %v1284
      %v1286 = vperm.slane %v1280, %v1285
      %v1288 = vunpack.c.l.s4 1934713408
      %v1289 = vunpack.c.0.s8 %v1288
      %v1290 = vperm.slane %v1282, %v1289
      %v1291 = vrot.slane %v1286, 4
      %v1292 = vsel %vm235, 0, %v1291
      %v1293 = vrot.slane %v1290, 4
      %v1294 = vsel %vm235, 0, %v1293
      %v1296 = vunpack.c.l.b16 %v1286
      %v1297 = vpack.c.b16 %v1296, %v1296
      %1298 = vrot.lane.b32.xlu0 %v1297, 8
      %v1299 = vpop.permute.xlu0 %1298
      %v1301 = vunpack.c.l.b16 %v1266
      %v1302 = vpack.c.b16 %v1301, %v1301
      %1303 = vrot.lane.b32.xlu0 %v1302, 16
      %v1304 = vpop.permute.xlu0 %1303
      %v1306 = vunpack.c.l.b16 %v1292
      %v1307 = vpack.c.b16 %v1306, %v1306
      %1308 = vrot.lane.b32.xlu0 %v1307, 24
      %v1309 = vpop.permute.xlu0 %1308
      %v1311 = vunpack.c.l.b16 %v1264
      %v1312 = vpack.c.b16 %v1311, %v1311
      %1313 = vrot.lane.b32.xlu0 %v1312, 32
      %v1314 = vpop.permute.xlu0 %1313
      %v1316 = vunpack.c.l.b16 %v1290
      %v1317 = vpack.c.b16 %v1316, %v1316
      %1318 = vrot.lane.b32.xlu0 %v1317, 40
      %v1319 = vpop.permute.xlu0 %1318
      %v1321 = vunpack.c.l.b16 %v1268
      %v1322 = vpack.c.b16 %v1321, %v1321
      %1323 = vrot.lane.b32.xlu0 %v1322, 48
      %v1324 = vpop.permute.xlu0 %1323
      %v1326 = vunpack.c.l.b16 %v1294
      %v1327 = vpack.c.b16 %v1326, %v1326
      %1328 = vrot.lane.b32.xlu0 %v1327, 56
      %v1329 = vpop.permute.xlu0 %1328
      %v1332 = vsel %vm312, %v1260, %v1299
      %v1334 = vsel %vm316, %v1332, %v1304
      %v1336 = vsel %vm319, %v1334, %v1309
      %v1338 = vsel %vm322, %v1336, %v1314
      %v1340 = vsel %vm325, %v1338, %v1319
      %v1342 = vsel %vm328, %v1340, %v1324
      %v1344 = vsel %vm331, %v1342, %v1329
      %v1346 = vrot.slane %v337, 4
      %v1347 = vshll.u32 %v188, 16
      %v1349 = vrot.slane %v1347, 5
      %v1350 = vor.u32 %v1346, %v1349
      %v1351 = vrot.slane %v1350, 4
      %v1353 = vshll.u32 %v189, 16
      %v1355 = vrot.slane %v1353, 5
      %v1356 = vsel %vm1182, %v1351, %v1355
      %v1358 = vrot.slane %v338, 4
      %v1359 = vshll.u32 %v190, 16
      %v1361 = vrot.slane %v1359, 5
      %v1362 = vor.u32 %v1358, %v1361
      %v1363 = vrot.slane %v1362, 4
      %v1365 = vshll.u32 %v191, 16
      %v1367 = vrot.slane %v1365, 5
      %v1368 = vsel %vm1182, %v1363, %v1367
      %v1370 = vrot.slane %v343, 4
      %v1371 = vshll.u32 %v192, 16
      %v1373 = vrot.slane %v1371, 5
      %v1374 = vor.u32 %v1370, %v1373
      %v1375 = vrot.slane %v1374, 4
      %v1377 = vshll.u32 %v193, 16
      %v1379 = vrot.slane %v1377, 5
      %v1380 = vsel %vm1182, %v1375, %v1379
      %v1382 = vrot.slane %v344, 4
      %v1383 = vshll.u32 %v194, 16
      %v1385 = vrot.slane %v1383, 5
      %v1386 = vor.u32 %v1382, %v1385
      %v1387 = vrot.slane %v1386, 4
      %v1389 = vshll.u32 %v195, 16
      %v1391 = vrot.slane %v1389, 5
      %v1392 = vsel %vm1182, %v1387, %v1391
      %v1395 = vpack.i.b16 %v1368, %v1356
      %v1396 = vshrl.u32 %v1356, 16
      %v1397 = vshrl.u32 %v1368, 16
      %v1398 = vpack.i.b16 %v1397, %v1396
      %v1401 = vpack.i.b16 %v1392, %v1380
      %v1402 = vshrl.u32 %v1380, 16
      %v1403 = vshrl.u32 %v1392, 16
      %v1404 = vpack.i.b16 %v1403, %v1402
      %v1407 = vunpack.c.l.s4 1983009808
      %v1408 = vunpack.c.0.s8 %v1407
      %v1409 = vperm.slane %v1395, %v1408
      %v1412 = vunpack.c.l.s4 1983009808
      %v1413 = vunpack.c.0.s8 %v1412
      %v1414 = vperm.slane %v1401, %v1413
      %v1415 = vrot.slane %v1414, 4
      %v1416 = vsel %vm235, %v1415, %v1409
      %v1417 = vrot.slane %v1409, 4
      %v1418 = vsel %vm235, %v1414, %v1417
      %v1420 = vunpack.c.l.s4 1934713408
      %v1421 = vunpack.c.0.s8 %v1420
      %v1422 = vperm.slane %v1416, %v1421
      %v1424 = vunpack.c.l.s4 1934713408
      %v1425 = vunpack.c.0.s8 %v1424
      %v1426 = vperm.slane %v1418, %v1425
      %v1427 = vrot.slane %v1422, 4
      %v1428 = vsel %vm235, 0, %v1427
      %v1429 = vrot.slane %v1426, 4
      %v1430 = vsel %vm235, 0, %v1429
      %v1433 = vunpack.c.l.s4 1983009808
      %v1434 = vunpack.c.0.s8 %v1433
      %v1435 = vperm.slane %v1398, %v1434
      %v1438 = vunpack.c.l.s4 1983009808
      %v1439 = vunpack.c.0.s8 %v1438
      %v1440 = vperm.slane %v1404, %v1439
      %v1441 = vrot.slane %v1440, 4
      %v1442 = vsel %vm235, %v1441, %v1435
      %v1443 = vrot.slane %v1435, 4
      %v1444 = vsel %vm235, %v1440, %v1443
      %v1446 = vunpack.c.l.s4 1934713408
      %v1447 = vunpack.c.0.s8 %v1446
      %v1448 = vperm.slane %v1442, %v1447
      %v1450 = vunpack.c.l.s4 1934713408
      %v1451 = vunpack.c.0.s8 %v1450
      %v1452 = vperm.slane %v1444, %v1451
      %v1453 = vrot.slane %v1448, 4
      %v1454 = vsel %vm235, 0, %v1453
      %v1455 = vrot.slane %v1452, 4
      %v1456 = vsel %vm235, 0, %v1455
      %v1458 = vunpack.c.l.b16 %v1448
      %v1459 = vpack.c.b16 %v1458, %v1458
      %1460 = vrot.lane.b32.xlu0 %v1459, 8
      %v1461 = vpop.permute.xlu0 %1460
      %v1463 = vunpack.c.l.b16 %v1428
      %v1464 = vpack.c.b16 %v1463, %v1463
      %1465 = vrot.lane.b32.xlu0 %v1464, 16
      %v1466 = vpop.permute.xlu0 %1465
      %v1468 = vunpack.c.l.b16 %v1454
      %v1469 = vpack.c.b16 %v1468, %v1468
      %1470 = vrot.lane.b32.xlu0 %v1469, 24
      %v1471 = vpop.permute.xlu0 %1470
      %v1473 = vunpack.c.l.b16 %v1426
      %v1474 = vpack.c.b16 %v1473, %v1473
      %1475 = vrot.lane.b32.xlu0 %v1474, 32
      %v1476 = vpop.permute.xlu0 %1475
      %v1478 = vunpack.c.l.b16 %v1452
      %v1479 = vpack.c.b16 %v1478, %v1478
      %1480 = vrot.lane.b32.xlu0 %v1479, 40
      %v1481 = vpop.permute.xlu0 %1480
      %v1483 = vunpack.c.l.b16 %v1430
      %v1484 = vpack.c.b16 %v1483, %v1483
      %1485 = vrot.lane.b32.xlu0 %v1484, 48
      %v1486 = vpop.permute.xlu0 %1485
      %v1488 = vunpack.c.l.b16 %v1456
      %v1489 = vpack.c.b16 %v1488, %v1488
      %1490 = vrot.lane.b32.xlu0 %v1489, 56
      %v1491 = vpop.permute.xlu0 %1490
      %v1494 = vsel %vm312, %v1422, %v1461
      %v1496 = vsel %vm316, %v1494, %v1466
      %v1498 = vsel %vm319, %v1496, %v1471
      %v1500 = vsel %vm322, %v1498, %v1476
      %v1502 = vsel %vm325, %v1500, %v1481
      %v1504 = vsel %vm328, %v1502, %v1486
      %v1506 = vsel %vm331, %v1504, %v1491
      %1507 = vrot.lane.b32.xlu0 %v1194, 127
      %v1508 = vpop.permute.xlu0 %1507
      %1509 = vrot.lane.b32.xlu0 %v1206, 127
      %v1510 = vpop.permute.xlu0 %1509
      %1511 = vrot.lane.b32.xlu0 %v1218, 127
      %v1512 = vpop.permute.xlu0 %1511
      %1513 = vrot.lane.b32.xlu0 %v1230, 127
      %v1514 = vpop.permute.xlu0 %1513
      %v1517 = vpack.i.b16 %v1510, %v1508
      %v1518 = vshrl.u32 %v1508, 16
      %v1519 = vshrl.u32 %v1510, 16
      %v1520 = vpack.i.b16 %v1519, %v1518
      %v1523 = vpack.i.b16 %v1514, %v1512
      %v1524 = vshrl.u32 %v1512, 16
      %v1525 = vshrl.u32 %v1514, 16
      %v1526 = vpack.i.b16 %v1525, %v1524
      %v1529 = vunpack.c.l.s4 1983009808
      %v1530 = vunpack.c.0.s8 %v1529
      %v1531 = vperm.slane %v1517, %v1530
      %v1534 = vunpack.c.l.s4 1983009808
      %v1535 = vunpack.c.0.s8 %v1534
      %v1536 = vperm.slane %v1523, %v1535
      %v1537 = vrot.slane %v1536, 4
      %v1538 = vsel %vm235, %v1537, %v1531
      %v1539 = vrot.slane %v1531, 4
      %v1540 = vsel %vm235, %v1536, %v1539
      %v1542 = vunpack.c.l.s4 1934713408
      %v1543 = vunpack.c.0.s8 %v1542
      %v1544 = vperm.slane %v1538, %v1543
      %v1546 = vunpack.c.l.s4 1934713408
      %v1547 = vunpack.c.0.s8 %v1546
      %v1548 = vperm.slane %v1540, %v1547
      %v1549 = vrot.slane %v1544, 4
      %v1550 = vsel %vm235, 0, %v1549
      %v1551 = vrot.slane %v1548, 4
      %v1552 = vsel %vm235, 0, %v1551
      %v1555 = vunpack.c.l.s4 1983009808
      %v1556 = vunpack.c.0.s8 %v1555
      %v1557 = vperm.slane %v1520, %v1556
      %v1560 = vunpack.c.l.s4 1983009808
      %v1561 = vunpack.c.0.s8 %v1560
      %v1562 = vperm.slane %v1526, %v1561
      %v1563 = vrot.slane %v1562, 4
      %v1564 = vsel %vm235, %v1563, %v1557
      %v1565 = vrot.slane %v1557, 4
      %v1566 = vsel %vm235, %v1562, %v1565
      %v1568 = vunpack.c.l.s4 1934713408
      %v1569 = vunpack.c.0.s8 %v1568
      %v1570 = vperm.slane %v1564, %v1569
      %v1572 = vunpack.c.l.s4 1934713408
      %v1573 = vunpack.c.0.s8 %v1572
      %v1574 = vperm.slane %v1566, %v1573
      %v1575 = vrot.slane %v1570, 4
      %v1576 = vsel %vm235, 0, %v1575
      %v1577 = vrot.slane %v1574, 4
      %v1578 = vsel %vm235, 0, %v1577
      %v1580 = vunpack.c.l.b16 %v1570
      %v1581 = vpack.c.b16 %v1580, %v1580
      %1582 = vrot.lane.b32.xlu0 %v1581, 8
      %v1583 = vpop.permute.xlu0 %1582
      %v1585 = vunpack.c.l.b16 %v1550
      %v1586 = vpack.c.b16 %v1585, %v1585
      %1587 = vrot.lane.b32.xlu0 %v1586, 16
      %v1588 = vpop.permute.xlu0 %1587
      %v1590 = vunpack.c.l.b16 %v1576
      %v1591 = vpack.c.b16 %v1590, %v1590
      %1592 = vrot.lane.b32.xlu0 %v1591, 24
      %v1593 = vpop.permute.xlu0 %1592
      %v1595 = vunpack.c.l.b16 %v1548
      %v1596 = vpack.c.b16 %v1595, %v1595
      %1597 = vrot.lane.b32.xlu0 %v1596, 32
      %v1598 = vpop.permute.xlu0 %1597
      %v1600 = vunpack.c.l.b16 %v1574
      %v1601 = vpack.c.b16 %v1600, %v1600
      %1602 = vrot.lane.b32.xlu0 %v1601, 40
      %v1603 = vpop.permute.xlu0 %1602
      %v1605 = vunpack.c.l.b16 %v1552
      %v1606 = vpack.c.b16 %v1605, %v1605
      %1607 = vrot.lane.b32.xlu0 %v1606, 48
      %v1608 = vpop.permute.xlu0 %1607
      %v1610 = vunpack.c.l.b16 %v1578
      %v1611 = vpack.c.b16 %v1610, %v1610
      %1612 = vrot.lane.b32.xlu0 %v1611, 56
      %v1613 = vpop.permute.xlu0 %1612
      %v1616 = vsel %vm312, %v1544, %v1583
      %v1618 = vsel %vm316, %v1616, %v1588
      %v1620 = vsel %vm319, %v1618, %v1593
      %v1622 = vsel %vm322, %v1620, %v1598
      %v1624 = vsel %vm325, %v1622, %v1603
      %v1626 = vsel %vm328, %v1624, %v1608
      %v1628 = vsel %vm331, %v1626, %v1613
      %1629 = vrot.lane.b32.xlu0 %v1356, 127
      %v1630 = vpop.permute.xlu0 %1629
      %1631 = vrot.lane.b32.xlu0 %v1368, 127
      %v1632 = vpop.permute.xlu0 %1631
      %1633 = vrot.lane.b32.xlu0 %v1380, 127
      %v1634 = vpop.permute.xlu0 %1633
      %1635 = vrot.lane.b32.xlu0 %v1392, 127
      %v1636 = vpop.permute.xlu0 %1635
      %v1639 = vpack.i.b16 %v1632, %v1630
      %v1640 = vshrl.u32 %v1630, 16
      %v1641 = vshrl.u32 %v1632, 16
      %v1642 = vpack.i.b16 %v1641, %v1640
      %v1645 = vpack.i.b16 %v1636, %v1634
      %v1646 = vshrl.u32 %v1634, 16
      %v1647 = vshrl.u32 %v1636, 16
      %v1648 = vpack.i.b16 %v1647, %v1646
      %v1651 = vunpack.c.l.s4 1983009808
      %v1652 = vunpack.c.0.s8 %v1651
      %v1653 = vperm.slane %v1639, %v1652
      %v1656 = vunpack.c.l.s4 1983009808
      %v1657 = vunpack.c.0.s8 %v1656
      %v1658 = vperm.slane %v1645, %v1657
      %v1659 = vrot.slane %v1658, 4
      %v1660 = vsel %vm235, %v1659, %v1653
      %v1661 = vrot.slane %v1653, 4
      %v1662 = vsel %vm235, %v1658, %v1661
      %v1664 = vunpack.c.l.s4 1934713408
      %v1665 = vunpack.c.0.s8 %v1664
      %v1666 = vperm.slane %v1660, %v1665
      %v1668 = vunpack.c.l.s4 1934713408
      %v1669 = vunpack.c.0.s8 %v1668
      %v1670 = vperm.slane %v1662, %v1669
      %v1671 = vrot.slane %v1666, 4
      %v1672 = vsel %vm235, 0, %v1671
      %v1673 = vrot.slane %v1670, 4
      %v1674 = vsel %vm235, 0, %v1673
      %v1677 = vunpack.c.l.s4 1983009808
      %v1678 = vunpack.c.0.s8 %v1677
      %v1679 = vperm.slane %v1642, %v1678
      %v1682 = vunpack.c.l.s4 1983009808
      %v1683 = vunpack.c.0.s8 %v1682
      %v1684 = vperm.slane %v1648, %v1683
      %v1685 = vrot.slane %v1684, 4
      %v1686 = vsel %vm235, %v1685, %v1679
      %v1687 = vrot.slane %v1679, 4
      %v1688 = vsel %vm235, %v1684, %v1687
      %v1690 = vunpack.c.l.s4 1934713408
      %v1691 = vunpack.c.0.s8 %v1690
      %v1692 = vperm.slane %v1686, %v1691
      %v1694 = vunpack.c.l.s4 1934713408
      %v1695 = vunpack.c.0.s8 %v1694
      %v1696 = vperm.slane %v1688, %v1695
      %v1697 = vrot.slane %v1692, 4
      %v1698 = vsel %vm235, 0, %v1697
      %v1699 = vrot.slane %v1696, 4
      %v1700 = vsel %vm235, 0, %v1699
      %v1702 = vunpack.c.l.b16 %v1692
      %v1703 = vpack.c.b16 %v1702, %v1702
      %1704 = vrot.lane.b32.xlu0 %v1703, 8
      %v1705 = vpop.permute.xlu0 %1704
      %v1707 = vunpack.c.l.b16 %v1672
      %v1708 = vpack.c.b16 %v1707, %v1707
      %1709 = vrot.lane.b32.xlu0 %v1708, 16
      %v1710 = vpop.permute.xlu0 %1709
      %v1712 = vunpack.c.l.b16 %v1698
      %v1713 = vpack.c.b16 %v1712, %v1712
      %1714 = vrot.lane.b32.xlu0 %v1713, 24
      %v1715 = vpop.permute.xlu0 %1714
      %v1717 = vunpack.c.l.b16 %v1670
      %v1718 = vpack.c.b16 %v1717, %v1717
      %1719 = vrot.lane.b32.xlu0 %v1718, 32
      %v1720 = vpop.permute.xlu0 %1719
      %v1722 = vunpack.c.l.b16 %v1696
      %v1723 = vpack.c.b16 %v1722, %v1722
      %1724 = vrot.lane.b32.xlu0 %v1723, 40
      %v1725 = vpop.permute.xlu0 %1724
      %v1727 = vunpack.c.l.b16 %v1674
      %v1728 = vpack.c.b16 %v1727, %v1727
      %1729 = vrot.lane.b32.xlu0 %v1728, 48
      %v1730 = vpop.permute.xlu0 %1729
      %v1732 = vunpack.c.l.b16 %v1700
      %v1733 = vpack.c.b16 %v1732, %v1732
      %1734 = vrot.lane.b32.xlu0 %v1733, 56
      %v1735 = vpop.permute.xlu0 %1734
      %v1738 = vsel %vm312, %v1666, %v1705
      %v1740 = vsel %vm316, %v1738, %v1710
      %v1742 = vsel %vm319, %v1740, %v1715
      %v1744 = vsel %vm322, %v1742, %v1720
      %v1746 = vsel %vm325, %v1744, %v1725
      %v1748 = vsel %vm328, %v1746, %v1730
      %v1750 = vsel %vm331, %v1748, %v1735
      %v1752 = vrot.slane %v703, 4
      %v1753 = vshll.u32 %v196, 16
      %v1755 = vrot.slane %v1753, 5
      %v1756 = vor.u32 %v1752, %v1755
      %v1757 = vrot.slane %v1756, 4
      %v1759 = vshll.u32 %v197, 16
      %v1761 = vrot.slane %v1759, 5
      %v1762 = vsel %vm1182, %v1757, %v1761
      %v1764 = vrot.slane %v704, 4
      %v1765 = vshll.u32 %v198, 16
      %v1767 = vrot.slane %v1765, 5
      %v1768 = vor.u32 %v1764, %v1767
      %v1769 = vrot.slane %v1768, 4
      %v1771 = vshll.u32 %v199, 16
      %v1773 = vrot.slane %v1771, 5
      %v1774 = vsel %vm1182, %v1769, %v1773
      %v1776 = vrot.slane %v709, 4
      %v1777 = vshll.u32 %v200, 16
      %v1779 = vrot.slane %v1777, 5
      %v1780 = vor.u32 %v1776, %v1779
      %v1781 = vrot.slane %v1780, 4
      %v1783 = vshll.u32 %v201, 16
      %v1785 = vrot.slane %v1783, 5
      %v1786 = vsel %vm1182, %v1781, %v1785
      %v1788 = vrot.slane %v710, 4
      %v1789 = vshll.u32 %v202, 16
      %v1791 = vrot.slane %v1789, 5
      %v1792 = vor.u32 %v1788, %v1791
      %v1793 = vrot.slane %v1792, 4
      %v1795 = vshll.u32 %v203, 16
      %v1797 = vrot.slane %v1795, 5
      %v1798 = vsel %vm1182, %v1793, %v1797
      %v1801 = vpack.i.b16 %v1774, %v1762
      %v1802 = vshrl.u32 %v1762, 16
      %v1803 = vshrl.u32 %v1774, 16
      %v1804 = vpack.i.b16 %v1803, %v1802
      %v1807 = vpack.i.b16 %v1798, %v1786
      %v1808 = vshrl.u32 %v1786, 16
      %v1809 = vshrl.u32 %v1798, 16
      %v1810 = vpack.i.b16 %v1809, %v1808
      %v1813 = vunpack.c.l.s4 1983009808
      %v1814 = vunpack.c.0.s8 %v1813
      %v1815 = vperm.slane %v1801, %v1814
      %v1818 = vunpack.c.l.s4 1983009808
      %v1819 = vunpack.c.0.s8 %v1818
      %v1820 = vperm.slane %v1807, %v1819
      %v1821 = vrot.slane %v1820, 4
      %v1822 = vsel %vm235, %v1821, %v1815
      %v1823 = vrot.slane %v1815, 4
      %v1824 = vsel %vm235, %v1820, %v1823
      %v1826 = vunpack.c.l.s4 1934713408
      %v1827 = vunpack.c.0.s8 %v1826
      %v1828 = vperm.slane %v1822, %v1827
      %v1830 = vunpack.c.l.s4 1934713408
      %v1831 = vunpack.c.0.s8 %v1830
      %v1832 = vperm.slane %v1824, %v1831
      %v1833 = vrot.slane %v1828, 4
      %v1834 = vsel %vm235, 0, %v1833
      %v1835 = vrot.slane %v1832, 4
      %v1836 = vsel %vm235, 0, %v1835
      %v1839 = vunpack.c.l.s4 1983009808
      %v1840 = vunpack.c.0.s8 %v1839
      %v1841 = vperm.slane %v1804, %v1840
      %v1844 = vunpack.c.l.s4 1983009808
      %v1845 = vunpack.c.0.s8 %v1844
      %v1846 = vperm.slane %v1810, %v1845
      %v1847 = vrot.slane %v1846, 4
      %v1848 = vsel %vm235, %v1847, %v1841
      %v1849 = vrot.slane %v1841, 4
      %v1850 = vsel %vm235, %v1846, %v1849
      %v1852 = vunpack.c.l.s4 1934713408
      %v1853 = vunpack.c.0.s8 %v1852
      %v1854 = vperm.slane %v1848, %v1853
      %v1856 = vunpack.c.l.s4 1934713408
      %v1857 = vunpack.c.0.s8 %v1856
      %v1858 = vperm.slane %v1850, %v1857
      %v1859 = vrot.slane %v1854, 4
      %v1860 = vsel %vm235, 0, %v1859
      %v1861 = vrot.slane %v1858, 4
      %v1862 = vsel %vm235, 0, %v1861
      %v1864 = vunpack.c.l.b16 %v1854
      %v1865 = vpack.c.b16 %v1864, %v1864
      %1866 = vrot.lane.b32.xlu0 %v1865, 8
      %v1867 = vpop.permute.xlu0 %1866
      %v1869 = vunpack.c.l.b16 %v1834
      %v1870 = vpack.c.b16 %v1869, %v1869
      %1871 = vrot.lane.b32.xlu0 %v1870, 16
      %v1872 = vpop.permute.xlu0 %1871
      %v1874 = vunpack.c.l.b16 %v1860
      %v1875 = vpack.c.b16 %v1874, %v1874
      %1876 = vrot.lane.b32.xlu0 %v1875, 24
      %v1877 = vpop.permute.xlu0 %1876
      %v1879 = vunpack.c.l.b16 %v1832
      %v1880 = vpack.c.b16 %v1879, %v1879
      %1881 = vrot.lane.b32.xlu0 %v1880, 32
      %v1882 = vpop.permute.xlu0 %1881
      %v1884 = vunpack.c.l.b16 %v1858
      %v1885 = vpack.c.b16 %v1884, %v1884
      %1886 = vrot.lane.b32.xlu0 %v1885, 40
      %v1887 = vpop.permute.xlu0 %1886
      %v1889 = vunpack.c.l.b16 %v1836
      %v1890 = vpack.c.b16 %v1889, %v1889
      %1891 = vrot.lane.b32.xlu0 %v1890, 48
      %v1892 = vpop.permute.xlu0 %1891
      %v1894 = vunpack.c.l.b16 %v1862
      %v1895 = vpack.c.b16 %v1894, %v1894
      %1896 = vrot.lane.b32.xlu0 %v1895, 56
      %v1897 = vpop.permute.xlu0 %1896
      %v1900 = vsel %vm312, %v1828, %v1867
      %v1902 = vsel %vm316, %v1900, %v1872
      %v1904 = vsel %vm319, %v1902, %v1877
      %v1906 = vsel %vm322, %v1904, %v1882
      %v1908 = vsel %vm325, %v1906, %v1887
      %v1910 = vsel %vm328, %v1908, %v1892
      %v1912 = vsel %vm331, %v1910, %v1897
      %v1914 = vrot.slane %v817, 4
      %v1915 = vshll.u32 %v204, 16
      %v1917 = vrot.slane %v1915, 5
      %v1918 = vor.u32 %v1914, %v1917
      %v1919 = vrot.slane %v1918, 4
      %v1921 = vshll.u32 %v205, 16
      %v1923 = vrot.slane %v1921, 5
      %v1924 = vsel %vm1182, %v1919, %v1923
      %v1926 = vrot.slane %v818, 4
      %v1927 = vshll.u32 %v206, 16
      %v1929 = vrot.slane %v1927, 5
      %v1930 = vor.u32 %v1926, %v1929
      %v1931 = vrot.slane %v1930, 4
      %v1933 = vshll.u32 %v207, 16
      %v1935 = vrot.slane %v1933, 5
      %v1936 = vsel %vm1182, %v1931, %v1935
      %v1938 = vrot.slane %v823, 4
      %v1939 = vshll.u32 %v208, 16
      %v1941 = vrot.slane %v1939, 5
      %v1942 = vor.u32 %v1938, %v1941
      %v1943 = vrot.slane %v1942, 4
      %v1945 = vshll.u32 %v209, 16
      %v1947 = vrot.slane %v1945, 5
      %v1948 = vsel %vm1182, %v1943, %v1947
      %v1950 = vrot.slane %v824, 4
      %v1951 = vshll.u32 %v210, 16
      %v1953 = vrot.slane %v1951, 5
      %v1954 = vor.u32 %v1950, %v1953
      %v1955 = vrot.slane %v1954, 4
      %v1957 = vshll.u32 %v211, 16
      %v1959 = vrot.slane %v1957, 5
      %v1960 = vsel %vm1182, %v1955, %v1959
      %v1963 = vpack.i.b16 %v1936, %v1924
      %v1964 = vshrl.u32 %v1924, 16
      %v1965 = vshrl.u32 %v1936, 16
      %v1966 = vpack.i.b16 %v1965, %v1964
      %v1969 = vpack.i.b16 %v1960, %v1948
      %v1970 = vshrl.u32 %v1948, 16
      %v1971 = vshrl.u32 %v1960, 16
      %v1972 = vpack.i.b16 %v1971, %v1970
      %v1975 = vunpack.c.l.s4 1983009808
      %v1976 = vunpack.c.0.s8 %v1975
      %v1977 = vperm.slane %v1963, %v1976
      %v1980 = vunpack.c.l.s4 1983009808
      %v1981 = vunpack.c.0.s8 %v1980
      %v1982 = vperm.slane %v1969, %v1981
      %v1983 = vrot.slane %v1982, 4
      %v1984 = vsel %vm235, %v1983, %v1977
      %v1985 = vrot.slane %v1977, 4
      %v1986 = vsel %vm235, %v1982, %v1985
      %v1988 = vunpack.c.l.s4 1934713408
      %v1989 = vunpack.c.0.s8 %v1988
      %v1990 = vperm.slane %v1984, %v1989
      %v1992 = vunpack.c.l.s4 1934713408
      %v1993 = vunpack.c.0.s8 %v1992
      %v1994 = vperm.slane %v1986, %v1993
      %v1995 = vrot.slane %v1990, 4
      %v1996 = vsel %vm235, 0, %v1995
      %v1997 = vrot.slane %v1994, 4
      %v1998 = vsel %vm235, 0, %v1997
      %v2001 = vunpack.c.l.s4 1983009808
      %v2002 = vunpack.c.0.s8 %v2001
      %v2003 = vperm.slane %v1966, %v2002
      %v2006 = vunpack.c.l.s4 1983009808
      %v2007 = vunpack.c.0.s8 %v2006
      %v2008 = vperm.slane %v1972, %v2007
      %v2009 = vrot.slane %v2008, 4
      %v2010 = vsel %vm235, %v2009, %v2003
      %v2011 = vrot.slane %v2003, 4
      %v2012 = vsel %vm235, %v2008, %v2011
      %v2014 = vunpack.c.l.s4 1934713408
      %v2015 = vunpack.c.0.s8 %v2014
      %v2016 = vperm.slane %v2010, %v2015
      %v2018 = vunpack.c.l.s4 1934713408
      %v2019 = vunpack.c.0.s8 %v2018
      %v2020 = vperm.slane %v2012, %v2019
      %v2021 = vrot.slane %v2016, 4
      %v2022 = vsel %vm235, 0, %v2021
      %v2023 = vrot.slane %v2020, 4
      %v2024 = vsel %vm235, 0, %v2023
      %v2026 = vunpack.c.l.b16 %v2016
      %v2027 = vpack.c.b16 %v2026, %v2026
      %2028 = vrot.lane.b32.xlu0 %v2027, 8
      %v2029 = vpop.permute.xlu0 %2028
      %v2031 = vunpack.c.l.b16 %v1996
      %v2032 = vpack.c.b16 %v2031, %v2031
      %2033 = vrot.lane.b32.xlu0 %v2032, 16
      %v2034 = vpop.permute.xlu0 %2033
      %v2036 = vunpack.c.l.b16 %v2022
      %v2037 = vpack.c.b16 %v2036, %v2036
      %2038 = vrot.lane.b32.xlu0 %v2037, 24
      %v2039 = vpop.permute.xlu0 %2038
      %v2041 = vunpack.c.l.b16 %v1994
      %v2042 = vpack.c.b16 %v2041, %v2041
      %2043 = vrot.lane.b32.xlu0 %v2042, 32
      %v2044 = vpop.permute.xlu0 %2043
      %v2046 = vunpack.c.l.b16 %v2020
      %v2047 = vpack.c.b16 %v2046, %v2046
      %2048 = vrot.lane.b32.xlu0 %v2047, 40
      %v2049 = vpop.permute.xlu0 %2048
      %v2051 = vunpack.c.l.b16 %v1998
      %v2052 = vpack.c.b16 %v2051, %v2051
      %2053 = vrot.lane.b32.xlu0 %v2052, 48
      %v2054 = vpop.permute.xlu0 %2053
      %v2056 = vunpack.c.l.b16 %v2024
      %v2057 = vpack.c.b16 %v2056, %v2056
      %2058 = vrot.lane.b32.xlu0 %v2057, 56
      %v2059 = vpop.permute.xlu0 %2058
      %v2062 = vsel %vm312, %v1990, %v2029
      %v2064 = vsel %vm316, %v2062, %v2034
      %v2066 = vsel %vm319, %v2064, %v2039
      %v2068 = vsel %vm322, %v2066, %v2044
      %v2070 = vsel %vm325, %v2068, %v2049
      %v2072 = vsel %vm328, %v2070, %v2054
      %v2074 = vsel %vm331, %v2072, %v2059
      %2075 = vrot.lane.b32.xlu0 %v1762, 127
      %v2076 = vpop.permute.xlu0 %2075
      %2077 = vrot.lane.b32.xlu0 %v1774, 127
      %v2078 = vpop.permute.xlu0 %2077
      %2079 = vrot.lane.b32.xlu0 %v1786, 127
      %v2080 = vpop.permute.xlu0 %2079
      %2081 = vrot.lane.b32.xlu0 %v1798, 127
      %v2082 = vpop.permute.xlu0 %2081
      %v2085 = vpack.i.b16 %v2078, %v2076
      %v2086 = vshrl.u32 %v2076, 16
      %v2087 = vshrl.u32 %v2078, 16
      %v2088 = vpack.i.b16 %v2087, %v2086
      %v2091 = vpack.i.b16 %v2082, %v2080
      %v2092 = vshrl.u32 %v2080, 16
      %v2093 = vshrl.u32 %v2082, 16
      %v2094 = vpack.i.b16 %v2093, %v2092
      %v2097 = vunpack.c.l.s4 1983009808
      %v2098 = vunpack.c.0.s8 %v2097
      %v2099 = vperm.slane %v2085, %v2098
      %v2102 = vunpack.c.l.s4 1983009808
      %v2103 = vunpack.c.0.s8 %v2102
      %v2104 = vperm.slane %v2091, %v2103
      %v2105 = vrot.slane %v2104, 4
      %v2106 = vsel %vm235, %v2105, %v2099
      %v2107 = vrot.slane %v2099, 4
      %v2108 = vsel %vm235, %v2104, %v2107
      %v2110 = vunpack.c.l.s4 1934713408
      %v2111 = vunpack.c.0.s8 %v2110
      %v2112 = vperm.slane %v2106, %v2111
      %v2114 = vunpack.c.l.s4 1934713408
      %v2115 = vunpack.c.0.s8 %v2114
      %v2116 = vperm.slane %v2108, %v2115
      %v2117 = vrot.slane %v2112, 4
      %v2118 = vsel %vm235, 0, %v2117
      %v2119 = vrot.slane %v2116, 4
      %v2120 = vsel %vm235, 0, %v2119
      %v2123 = vunpack.c.l.s4 1983009808
      %v2124 = vunpack.c.0.s8 %v2123
      %v2125 = vperm.slane %v2088, %v2124
      %v2128 = vunpack.c.l.s4 1983009808
      %v2129 = vunpack.c.0.s8 %v2128
      %v2130 = vperm.slane %v2094, %v2129
      %v2131 = vrot.slane %v2130, 4
      %v2132 = vsel %vm235, %v2131, %v2125
      %v2133 = vrot.slane %v2125, 4
      %v2134 = vsel %vm235, %v2130, %v2133
      %v2136 = vunpack.c.l.s4 1934713408
      %v2137 = vunpack.c.0.s8 %v2136
      %v2138 = vperm.slane %v2132, %v2137
      %v2140 = vunpack.c.l.s4 1934713408
      %v2141 = vunpack.c.0.s8 %v2140
      %v2142 = vperm.slane %v2134, %v2141
      %v2143 = vrot.slane %v2138, 4
      %v2144 = vsel %vm235, 0, %v2143
      %v2145 = vrot.slane %v2142, 4
      %v2146 = vsel %vm235, 0, %v2145
      %v2148 = vunpack.c.l.b16 %v2138
      %v2149 = vpack.c.b16 %v2148, %v2148
      %2150 = vrot.lane.b32.xlu0 %v2149, 8
      %v2151 = vpop.permute.xlu0 %2150
      %v2153 = vunpack.c.l.b16 %v2118
      %v2154 = vpack.c.b16 %v2153, %v2153
      %2155 = vrot.lane.b32.xlu0 %v2154, 16
      %v2156 = vpop.permute.xlu0 %2155
      %v2158 = vunpack.c.l.b16 %v2144
      %v2159 = vpack.c.b16 %v2158, %v2158
      %2160 = vrot.lane.b32.xlu0 %v2159, 24
      %v2161 = vpop.permute.xlu0 %2160
      %v2163 = vunpack.c.l.b16 %v2116
      %v2164 = vpack.c.b16 %v2163, %v2163
      %2165 = vrot.lane.b32.xlu0 %v2164, 32
      %v2166 = vpop.permute.xlu0 %2165
      %v2168 = vunpack.c.l.b16 %v2142
      %v2169 = vpack.c.b16 %v2168, %v2168
      %2170 = vrot.lane.b32.xlu0 %v2169, 40
      %v2171 = vpop.permute.xlu0 %2170
      %v2173 = vunpack.c.l.b16 %v2120
      %v2174 = vpack.c.b16 %v2173, %v2173
      %2175 = vrot.lane.b32.xlu0 %v2174, 48
      %v2176 = vpop.permute.xlu0 %2175
      %v2178 = vunpack.c.l.b16 %v2146
      %v2179 = vpack.c.b16 %v2178, %v2178
      %2180 = vrot.lane.b32.xlu0 %v2179, 56
      %v2181 = vpop.permute.xlu0 %2180
      %v2184 = vsel %vm312, %v2112, %v2151
      %v2186 = vsel %vm316, %v2184, %v2156
      %v2188 = vsel %vm319, %v2186, %v2161
      %v2190 = vsel %vm322, %v2188, %v2166
      %v2192 = vsel %vm325, %v2190, %v2171
      %v2194 = vsel %vm328, %v2192, %v2176
      %v2196 = vsel %vm331, %v2194, %v2181
      %2197 = vrot.lane.b32.xlu0 %v1924, 127
      %v2198 = vpop.permute.xlu0 %2197
      %2199 = vrot.lane.b32.xlu0 %v1936, 127
      %v2200 = vpop.permute.xlu0 %2199
      %2201 = vrot.lane.b32.xlu0 %v1948, 127
      %v2202 = vpop.permute.xlu0 %2201
      %2203 = vrot.lane.b32.xlu0 %v1960, 127
      %v2204 = vpop.permute.xlu0 %2203
      %v2207 = vpack.i.b16 %v2200, %v2198
      %v2208 = vshrl.u32 %v2198, 16
      %v2209 = vshrl.u32 %v2200, 16
      %v2210 = vpack.i.b16 %v2209, %v2208
      %v2213 = vpack.i.b16 %v2204, %v2202
      %v2214 = vshrl.u32 %v2202, 16
      %v2215 = vshrl.u32 %v2204, 16
      %v2216 = vpack.i.b16 %v2215, %v2214
      %v2219 = vunpack.c.l.s4 1983009808
      %v2220 = vunpack.c.0.s8 %v2219
      %v2221 = vperm.slane %v2207, %v2220
      %v2224 = vunpack.c.l.s4 1983009808
      %v2225 = vunpack.c.0.s8 %v2224
      %v2226 = vperm.slane %v2213, %v2225
      %v2227 = vrot.slane %v2226, 4
      %v2228 = vsel %vm235, %v2227, %v2221
      %v2229 = vrot.slane %v2221, 4
      %v2230 = vsel %vm235, %v2226, %v2229
      %v2232 = vunpack.c.l.s4 1934713408
      %v2233 = vunpack.c.0.s8 %v2232
      %v2234 = vperm.slane %v2228, %v2233
      %v2236 = vunpack.c.l.s4 1934713408
      %v2237 = vunpack.c.0.s8 %v2236
      %v2238 = vperm.slane %v2230, %v2237
      %v2239 = vrot.slane %v2234, 4
      %v2240 = vsel %vm235, 0, %v2239
      %v2241 = vrot.slane %v2238, 4
      %v2242 = vsel %vm235, 0, %v2241
      %v2245 = vunpack.c.l.s4 1983009808
      %v2246 = vunpack.c.0.s8 %v2245
      %v2247 = vperm.slane %v2210, %v2246
      %v2250 = vunpack.c.l.s4 1983009808
      %v2251 = vunpack.c.0.s8 %v2250
      %v2252 = vperm.slane %v2216, %v2251
      %v2253 = vrot.slane %v2252, 4
      %v2254 = vsel %vm235, %v2253, %v2247
      %v2255 = vrot.slane %v2247, 4
      %v2256 = vsel %vm235, %v2252, %v2255
      %v2258 = vunpack.c.l.s4 1934713408
      %v2259 = vunpack.c.0.s8 %v2258
      %v2260 = vperm.slane %v2254, %v2259
      %v2262 = vunpack.c.l.s4 1934713408
      %v2263 = vunpack.c.0.s8 %v2262
      %v2264 = vperm.slane %v2256, %v2263
      %v2265 = vrot.slane %v2260, 4
      %v2266 = vsel %vm235, 0, %v2265
      %v2267 = vrot.slane %v2264, 4
      %v2268 = vsel %vm235, 0, %v2267
      %v2270 = vunpack.c.l.b16 %v2260
      %v2271 = vpack.c.b16 %v2270, %v2270
      %2272 = vrot.lane.b32.xlu0 %v2271, 8
      %v2273 = vpop.permute.xlu0 %2272
      %v2275 = vunpack.c.l.b16 %v2240
      %v2276 = vpack.c.b16 %v2275, %v2275
      %2277 = vrot.lane.b32.xlu0 %v2276, 16
      %v2278 = vpop.permute.xlu0 %2277
      %v2280 = vunpack.c.l.b16 %v2266
      %v2281 = vpack.c.b16 %v2280, %v2280
      %2282 = vrot.lane.b32.xlu0 %v2281, 24
      %v2283 = vpop.permute.xlu0 %2282
      %v2285 = vunpack.c.l.b16 %v2238
      %v2286 = vpack.c.b16 %v2285, %v2285
      %2287 = vrot.lane.b32.xlu0 %v2286, 32
      %v2288 = vpop.permute.xlu0 %2287
      %v2290 = vunpack.c.l.b16 %v2264
      %v2291 = vpack.c.b16 %v2290, %v2290
      %2292 = vrot.lane.b32.xlu0 %v2291, 40
      %v2293 = vpop.permute.xlu0 %2292
      %v2295 = vunpack.c.l.b16 %v2242
      %v2296 = vpack.c.b16 %v2295, %v2295
      %2297 = vrot.lane.b32.xlu0 %v2296, 48
      %v2298 = vpop.permute.xlu0 %2297
      %v2300 = vunpack.c.l.b16 %v2268
      %v2301 = vpack.c.b16 %v2300, %v2300
      %2302 = vrot.lane.b32.xlu0 %v2301, 56
      %v2303 = vpop.permute.xlu0 %2302
      %v2306 = vsel %vm312, %v2234, %v2273
      %v2308 = vsel %vm316, %v2306, %v2278
      %v2310 = vsel %vm319, %v2308, %v2283
      %v2312 = vsel %vm322, %v2310, %v2288
      %v2314 = vsel %vm325, %v2312, %v2293
      %v2316 = vsel %vm328, %v2314, %v2298
      %v2318 = vsel %vm331, %v2316, %v2303
      %v2320 = vrot.slane %v447, 6
      %v2322 = vrot.slane %v573, 4
      %v2324 = vrot.slane %v699, 2
      %v2326 = vrot.slane %v927, 6
      %v2328 = vrot.slane %v1053, 4
      %v2330 = vrot.slane %v1179, 2
      %v2332 = vrot.slane %v1506, 6
      %v2334 = vrot.slane %v1628, 4
      %v2336 = vrot.slane %v1750, 2
      %v2338 = vrot.slane %v2074, 6
      %v2340 = vrot.slane %v2196, 4
      %v2342 = vrot.slane %v2318, 2
      %vm2343 = vcmask 1041408
      %v2345 = vsel %vm2343, %v333, %v2320
      %vm2346 = vcmask 1043456
      %v2348 = vsel %vm2346, %v2345, %v2322
      %vm2349 = vcmask 1045504
      %v2351 = vsel %vm2349, %v2348, %v2324
      %v2354 = vsel %vm2343, %v813, %v2326
      %v2356 = vsel %vm2346, %v2354, %v2328
      %v2358 = vsel %vm2349, %v2356, %v2330
      %v2361 = vsel %vm2343, %v1344, %v2332
      %v2363 = vsel %vm2346, %v2361, %v2334
      %v2365 = vsel %vm2349, %v2363, %v2336
      %v2368 = vsel %vm2343, %v1912, %v2338
      %v2370 = vsel %vm2346, %v2368, %v2340
      %v2372 = vsel %vm2349, %v2370, %v2342
      %v2374 = vld [vmem:[%s171] sm:$0xf]
      %vm2375 = vcmask 523264
      %v2377 = vsel %vm2375, %v2374, 0
      %2379 = vmatpush.bf16.msra.mxu0 0
      %2380 = vmatpush.bf16.msra.mxu0 0
      %2381 = vmatpush.bf16.msra.mxu0 0
      %2382 = vmatpush.bf16.msra.mxu0 0
      %2383 = vmatpush.bf16.msra.mxu0 %v2372
      %2384 = vmatpush.bf16.msra.mxu0 %v2365
      %2385 = vmatpush.bf16.msra.mxu0 %v2358
      %2386 = vmatpush.bf16.msra.mxu0 %v2351
      %2387 = vmatmul.bf16.gmra.mxu0 %v2377
      %v2388 = vpop.f32.mrf.mxu0
      %v2389 = vadd.f32 0.0, %v2388
      %v2390 = vpop.f32.mrf.mxu0
      %2391 = vdwg.mxu0
      %v2392 = vsel %vm2375, %v2389, 0.0
      %2393 = vadd.xlane.f32.xlu0 %v2392
      %v2394 = vpop.xlane.xlu0 %2393
      %v2395 = vmul.f32 %v2394, 0.015625
      %v2396 = vmul.f32 %v2389, %v2389
      %v2397 = vsel %vm2375, %v2396, 0.0
      %2398 = vadd.xlane.f32.xlu0 %v2397
      %v2399 = vpop.xlane.xlu0 %2398
      %v2400 = vmul.f32 %v2399, 0.015625
      %v2401 = vmul.f32 %v2395, %v2395
      %v2402 = vsub.f32 %v2400, %v2401
      %v2403 = vadd.f32 %v2402, 1e-05
      %v2404 = vrsqrt.pop %v2403
      %v2405 = vmul.f32 %v2404, %v2403
      %v2406 = vmul.f32 %v2405, %v2404
      %v2407 = vmul.f32 0.5, %v2406
      %v2408 = vsub.f32 1.5, %v2407
      %v2409 = vmul.f32 %v2404, %v2408
      %vm2410 = vweird.f32 %v2403
      %vm2411 = vweird.f32 %v2404
      %vm2412 = vmor %vm2410, %vm2411
      %v2413 = vsel %vm2412, %v2404, %v2409
      %v2414 = vmul.f32 %v2389, %v2413
      %v2415 = vmul.f32 %v2395, %v2413
      %v2416 = vsub.f32 %v2414, %v2415
      %vm2417 = vcmp.ge.f32.partialorder %v2416, 0.0
      %v2418 = vmul.f32 %v2416, 0.2
      %v2419 = vsel %vm2417, %v2416, %v2418
      %2420 = vst.msk [vmem:[%s178] sm:$0xff] %vm2375, %v2419
      %p2421 = scmp.lt.s32.totalorder %s17, 1
      %s2422 = scalar_select %p2421, %s17, 1
      %p2423 = scmp.lt.s32.totalorder %s18, 0
      %s2424 = scalar_select %p2423, %s18, 0
      %s2425 = sadd.s32 %s2424, %s2422
      %s2426 = smul.addr %s2425, 8
      %s2427 = scalar_lea.vmem %s2, %s2426
      // Predicated region
      $region29: #{unet_down.1} parent=27 // pred_check
        %p2428 = pneg %p97
      $region30: #{unet_down.1} parent=27 // pred_check_branch
        %2430 = sbr.rel (%p2428) target = $region32
      $region31: #{unet_down.1} parent=27 // pred_region
        _
      $region32: #{unet_down.1} parent=27 // pred_fallthru
        _
    $region28: #{unet_down.1} parent=5 // pred_fallthru
      _
    %p2431 = scmp.le.s32.totalorder 2, %s8
    // Predicated region
    $region33: #{unet_down.1} parent=5 // pred_check
      %p2432 = pneg %p2431
    $region34: #{unet_down.1} parent=5 // pred_check_branch
      %2434 = sbr.rel (%p2432) target = $region36
    $region35: #{unet_down.1} parent=5 // pred_region
      %s2435 = ssub.s32 %s8, 2
      // Predicated region
      $region37: #{unet_down.1} parent=35 // pred_check
        %p2436 = pneg %p103
      $region38: #{unet_down.1} parent=35 // pred_check_branch
        %2438 = sbr.rel (%p2436) target = $region40
      $region39: #{unet_down.1} parent=35 // pred_region
        %p2439 = scmp.lt.s32.totalorder %s19, 1
        %s2440 = scalar_select %p2439, %s19, 1
        %p2441 = scmp.lt.s32.totalorder %s20, 0
        %s2442 = scalar_select %p2441, %s20, 0
        %s2443 = sadd.s32 %s2442, %s2440
        %s2444 = smul.addr %s2443, 8
        %s2445 = scalar_lea.vmem %s2, %s2444
      $region40: #{unet_down.1} parent=35 // pred_fallthru
        _
    $region36: #{unet_down.1} parent=5 // pred_fallthru
      _
  $region6: #{unet_down.1} parent=0 // loop_footer
    %s12 = sadd.s32 1, %s8
  $region7: #{unet_down.1} parent=0 // loop_footer_branch
    %7 = sbr.rel target = $region3
  $region8: #{unet_down.1} parent=0 // loop_exit
    _

</llo_original>
